<compile_context>
chip_gen: v6e
topology: v6e:2x2x1
jax: 0.10.0
libtpu: 0.0.40
codegen_flags: <defaults>
</compile_context>

<pallas_src>
import jax
import jax.numpy as jnp
from jax import lax
from jax.experimental import pallas as pl
from jax.experimental.pallas import tpu as pltpu

# ---- hyperparameters consistent with the module ----
VOCAB = 16
EMBD = 32
N_HEAD = 2
HEAD_SIZE = 8
N_LAYER = 2
BATCH = 2
LN_EPS = 1e-5  # PyTorch nn.LayerNorm default

NHH = N_HEAD * HEAD_SIZE                       # 16

# --- packed bf16 32-lane weight slab (row offsets) ---
R_MSA = 0                                      # L x (512, 32): merged hproj+concat+saproj
R_W2 = N_LAYER * NHH * EMBD                    # 1024: L x (128, 32): ffw2^T
R_LM = R_W2 + N_LAYER * 4 * EMBD               # 1280: (32, 32): lm_head^T, cols >= VOCAB are 0
W32_ROWS = R_LM + EMBD                         # 1312

# --- packed bf16 128-lane weight slab (row offsets) ---
RW_W1 = 0                                      # L x (32, 128): ffw1^T with ln3 gamma folded in
RW_WTOK = N_LAYER * EMBD                       # 64: (32, 128): tok-side weights, layer l in
                                               #     lanes [32l, 32l+18) (ln2 gamma folded in)
W128_ROWS = RW_WTOK + EMBD                     # 96

# --- packed f32 vector slab (one vector per row, padded to 128 lanes) ---
VR_LN1G = 0                                    # + l
VR_LN1B = VR_LN1G + N_LAYER                    # + l
VR_LNFG = VR_LN1B + N_LAYER
VR_LNFB = VR_LNFG + 1
VR_BTOK = VR_LNFB + 1                          # merged tok-side bias, layer l in lanes [32l, 32l+18)
VR_BSA = VR_BTOK + 1                           # + l
VR_B1 = VR_BSA + N_LAYER                       # + l (ffw1 bias with ln3 beta folded in)
VR_B2 = VR_B1 + N_LAYER                        # + l
VR_LMB = VR_B2 + N_LAYER
VEC_ROWS = 16


def _normalize(x):
    mu = jnp.mean(x, axis=-1, keepdims=True)
    var = jnp.mean(jnp.square(x - mu), axis=-1, keepdims=True)
    return (x - mu) * lax.rsqrt(var + LN_EPS)


def _layernorm(x, g, b):
    return _normalize(x) * g + b


# ----------------------------------------------------------------------------
# Kernel: one grid step == one forward(state, idx) step of the module.
# ----------------------------------------------------------------------------
def _transformer_kernel(idx_ref, state0_ref, tab_ref, vec_ref, w32_ref, w128_ref,
                        out_ref, st_ref):
    B, E, V, H, NH, L = BATCH, EMBD, VOCAB, HEAD_SIZE, N_HEAD, N_LAYER
    f32, bf16 = jnp.float32, jnp.bfloat16
    t = pl.program_id(0)

    @pl.when(t == 0)
    def _():
        st_ref[...] = state0_ref[...]

    vec = vec_ref[...]                                    # (16, 128) f32: LN params & biases
    state = st_ref[...]                                   # (B, E) f32, carried across steps

    # ---- embedding gather: B direct dynamic row reads from the f32 table (exact) ----
    tok = jnp.concatenate(
        [tab_ref[pl.ds(idx_ref[t * B + b], 1), :] for b in range(B)], axis=0)     # (B, E)

    # ---- tok-side work for ALL layers fused into one matmul (tok is constant
    #      across blocks within a step); layer l output in lanes [32l, 32l+32) ----
    hat2 = _normalize(tok)                                # ln2 affine folded into weights
    wtok = w128_ref[pl.ds(RW_WTOK, E), :]                 # (E, 128) bf16
    tk_all = (jnp.dot(hat2.astype(bf16), wtok, preferred_element_type=f32)
              + vec[VR_BTOK, :][None, :])                 # (B, 128)

    for l in range(L):
        tk = tk_all[:, 32 * l:32 * l + 32]                # (C=B, 32): [:16]=value pre-tanh,
                                                          #            [16:18]=A coefficients
        x1 = _layernorm(state, vec[VR_LN1G + l, :E], vec[VR_LN1B + l, :E])          # (B, E)

        # wei[b, h*C + c, e] = softmax_e( x1[b, e] * A[c, h] )   -- both heads at once.
        # (The additive query/key-bias coefficient is constant along e, so it cancels
        #  exactly in softmax(dim=-2); 1/sqrt(H) is folded into A host-side.)
        a = tk[:, NHH:NHH + NH]                                                     # (C, NH)
        z = jnp.concatenate(
            [x1[:, None, :] * a[:, h:h + 1][None, :, :] for h in range(NH)],
            axis=1)                                                                 # (B, NH*C, E)
        z = jnp.exp(z - jnp.max(z, axis=-1, keepdims=True))      # one max / one exp per layer
        wei = z * pl.reciprocal(jnp.sum(z, axis=-1, keepdims=True), approx=True)

        # head outputs for ALL heads: out[b, h*H + k, e] = tanh( sum_c wei * v )
        vmatT = jnp.tanh(tk[:, :NHH]).T                                             # (NH*H, C)
        pieces = []
        for h in range(NH):
            vT_h = vmatT[h * H:(h + 1) * H, :]                                      # (H, C)
            acc = None
            for c in range(B):
                term = wei[:, h * B + c, :][:, None, :] * vT_h[:, c:c + 1][None, :, :]
                acc = term if acc is None else acc + term                           # (B, H, E)
            pieces.append(acc)
        out = jnp.tanh(jnp.concatenate(pieces, axis=1))           # (B, NH*H, E): one tanh
        flat = out.reshape(B, NHH * E)                            # (B, 512), (h, k, e) order

        msa = w32_ref[pl.ds(R_MSA + NHH * E * l, NHH * E), :]     # (512, 32) bf16
        sa = (jnp.dot(flat.astype(bf16), msa, preferred_element_type=f32)
              + vec[VR_BSA + l, :E][None, :])
        state = state + sa

        # ---- feed-forward (ln3 affine folded into ffw1 weights/bias host-side) ----
        hat3 = _normalize(state)
        w1 = w128_ref[pl.ds(RW_W1 + E * l, E), :]                 # (E, 4E) bf16
        hm = jnp.tanh(jnp.dot(hat3.astype(bf16), w1, preferred_element_type=f32)
                      + vec[VR_B1 + l, :][None, :])               # (B, 4E)
        w2 = w32_ref[pl.ds(R_W2 + 4 * E * l, 4 * E), :]           # (4E, E) bf16
        state = (state
                 + jnp.dot(hm.astype(bf16), w2, preferred_element_type=f32)
                 + vec[VR_B2 + l, :E][None, :])

    # ---- final LayerNorm + lm_head ----
    state_out = _layernorm(state, vec[VR_LNFG, :E], vec[VR_LNFB, :E])
    lm = w32_ref[pl.ds(R_LM, E), :]                               # (E, 32) bf16, cols >= V are 0
    logits = (jnp.dot(state_out.astype(bf16), lm, preferred_element_type=f32)
              + vec[VR_LMB, :E][None, :])                         # (B, 32), cols >= V are 0

    st_ref[...] = state_out                                       # carry == repeated forward()
    out_ref[0] = jnp.concatenate(                                 # one dense (B, 128) store
        [state_out, logits, jnp.zeros((B, 128 - 2 * E), f32)], axis=-1)


# ----------------------------------------------------------------------------
# Wrappers
# ----------------------------------------------------------------------------
@jax.jit
def recurrent_transformer_rollout(packed, state, idx_seq):
    """Runs T chained forward() steps in ONE pallas_call (one grid step per token)."""
    T = idx_seq.shape[0]
    const = lambda t, idx: (0, 0)
    out = pl.pallas_call(
        _transformer_kernel,
        out_shape=jax.ShapeDtypeStruct((T, BATCH, 128), jnp.float32),
        grid_spec=pltpu.PrefetchScalarGridSpec(
            num_scalar_prefetch=1,
            grid=(T,),
            in_specs=[
                pl.BlockSpec((BATCH, EMBD), const),          # initial state (f32)
                pl.BlockSpec((VOCAB, EMBD), const),          # token table (f32, exact gather)
                pl.BlockSpec((VEC_ROWS, 128), const),        # LN params & biases (f32)
                pl.BlockSpec((W32_ROWS, EMBD), const),       # packed 32-lane weights (bf16)
                pl.BlockSpec((W128_ROWS, 128), const),       # packed 128-lane weights (bf16)
            ],
            out_specs=pl.BlockSpec((1, BATCH, 128), lambda t, idx: (t, 0, 0)),
            scratch_shapes=[pltpu.VMEM((BATCH, EMBD), jnp.float32)],   # recurrent state carry
        ),
        compiler_params=pltpu.CompilerParams(dimension_semantics=("arbitrary",)),
    )(idx_seq.reshape(-1).astype(jnp.int32), state.astype(jnp.float32),
      packed["tab"], packed["vec"], packed["w32"], packed["w128"])
    return out[:, :, :EMBD], out[:, :, EMBD:EMBD + VOCAB]


def recurrent_transformer_forward(packed, state, idx):
    """Exactly the module's forward(state, idx): a length-1 rollout."""
    states, logits = recurrent_transformer_rollout(packed, state, idx[None, :])
    return states[0], logits[0]


# ----------------------------------------------------------------------------
# Host-side parameter packing (one-time; pure f32 weight folding, then bf16 cast)
# ----------------------------------------------------------------------------
def pack_params(p):
    f32 = jnp.float32
    L, nH, H, E, V = N_LAYER, N_HEAD, HEAD_SIZE, EMBD, VOCAB
    s = float(H) ** -0.5

    with jax.default_matmul_precision("highest"):
        # Fold per-head query/key Linears:  wei[b,e,c] = x1[b,e]*A[c] + const(c);
        # A[c] = ln2(tok)[c].wA + cA.  const(c) cancels in softmax over e -> dropped.
        wA = s * jnp.einsum("lhk,lhke->lhe", p["query_w"], p["key_w"])       # (L,nH,E)
        cA = s * jnp.einsum("lhk,lhk->lh", p["query_w"], p["key_b"])         # (L,nH)

        # tok-side weights: one (E, 128) RHS for all layers, ln2 affine folded in.
        wtok = jnp.zeros((E, 128), f32)
        btok = jnp.zeros((128,), f32)
        for l in range(L):
            g2, b2 = p["ln2_g"][l], p["ln2_b"][l]
            cols = [g2[:, None] * p["value_w"][l, h].T for h in range(nH)]   # (E, H) each
            cols += [(g2 * wA[l, h])[:, None] for h in range(nH)]            # (E, 1) each
            w = jnp.concatenate(cols, axis=1)                                # (E, 18)
            wtok = wtok.at[:, 32 * l:32 * l + w.shape[1]].set(w)
            bias = jnp.concatenate(
                [jnp.concatenate([b2 @ p["value_w"][l, h].T for h in range(nH)]),
                 jnp.stack([b2 @ wA[l, h] + cA[l, h] for h in range(nH)])])  # (18,)
            btok = btok.at[32 * l:32 * l + bias.shape[0]].set(bias)

        # merge hproj + concat + saproj:  sa = flat(B, nH*H*E) @ msa_l + bsa_l
        msa, bsa = [], []
        for l in range(L):
            sp = p["saproj_w"][l].reshape(E, nH, E)                          # sp[p', h, e]
            m4 = jnp.einsum("phe,hk->hkep", sp, p["hproj_w"][l])             # (nH,H,E,E)
            msa.append(m4.reshape(nH * H * E, E))                            # (512, 32)
            bsa.append(p["saproj_b"][l] + jnp.einsum("phe,h->p", sp, p["hproj_b"][l]))

        # ffw1 with ln3 affine folded in
        w1f = [p["ln3_g"][l][:, None] * p["ffw1_w"][l].T for l in range(L)]          # (E, 4E)
        b1f = [p["ffw1_b"][l] + p["ln3_b"][l] @ p["ffw1_w"][l].T for l in range(L)]  # (4E,)

        lm_wt = jnp.pad(p["lm_w"].T, ((0, 0), (0, E - V)))                   # (32, 32)

    def row128(v):
        v = jnp.asarray(v, f32).reshape(-1)
        return jnp.pad(v, (0, 128 - v.shape[0]))

    rows = [row128(p["ln1_g"][l]) for l in range(L)]
    rows += [row128(p["ln1_b"][l]) for l in range(L)]
    rows += [row128(p["lnf_g"]), row128(p["lnf_b"])]
    rows += [btok]
    rows += [row128(bsa[l]) for l in range(L)]
    rows += [row128(b1f[l]) for l in range(L)]
    rows += [row128(p["ffw2_b"][l]) for l in range(L)]
    rows += [row128(p["lm_b"])]
    while len(rows) < VEC_ROWS:
        rows.append(jnp.zeros((128,), f32))
    vec = jnp.stack(rows, axis=0)                                            # (16, 128) f32

    w32 = jnp.concatenate(
        msa + [p["ffw2_w"][l].T for l in range(L)] + [lm_wt], axis=0)        # (1312, 32)
    assert w32.shape == (W32_ROWS, E)
    w128 = jnp.concatenate(w1f + [wtok], axis=0)                             # (96, 128)
    assert w128.shape == (W128_ROWS, 128)

    return dict(tab=jnp.asarray(p["token_table"], f32),
                vec=vec,
                w32=w32.astype(jnp.bfloat16),
                w128=w128.astype(jnp.bfloat16))


# ----------------------------------------------------------------------------
# Deterministic init matching the PyTorch module's _init_weights
# (Linear / Embedding / token table ~ N(0, 0.02); biases 0; LN gamma 1, beta 0)
# ----------------------------------------------------------------------------
def init_params(seed=0):
    base = jax.random.PRNGKey(seed)
    counter = [0]

    def nrm(shape):
        counter[0] += 1
        k = jax.random.fold_in(base, counter[0])
        return 0.02 * jax.random.normal(k, shape, dtype=jnp.float32)

    L, nH, H, E, V = N_LAYER, N_HEAD, HEAD_SIZE, EMBD, VOCAB
    zeros = lambda s: jnp.zeros(s, jnp.float32)
    ones = lambda s: jnp.ones(s, jnp.float32)
    return dict(
        token_table=nrm((V, E)),
        ln1_g=ones((L, E)), ln1_b=zeros((L, E)),
        ln2_g=ones((L, E)), ln2_b=zeros((L, E)),
        ln3_g=ones((L, E)), ln3_b=zeros((L, E)),
        key_w=nrm((L, nH, H, E)), key_b=zeros((L, nH, H)),
        query_w=nrm((L, nH, H)), query_b=zeros((L, nH, H)),   # Linear(1, H) weight squeezed
        value_w=nrm((L, nH, H, E)),                           # bias=False
        hproj_w=nrm((L, nH, H)), hproj_b=zeros((L, nH)),      # Linear(H, 1) weight squeezed
        saproj_w=nrm((L, E, E * nH)), saproj_b=zeros((L, E)),
        ffw1_w=nrm((L, 4 * E, E)), ffw1_b=zeros((L, 4 * E)),
        ffw2_w=nrm((L, E, 4 * E)), ffw2_b=zeros((L, E)),
        lnf_g=ones((E,)), lnf_b=zeros((E,)),
        lm_w=nrm((V, E)), lm_b=zeros((V,)),
        # NOTE: Head.query_pos / Head.positions / initState are unused by forward().
    )


def reference_forward(params, state, idx):
    """Pure-JAX mirror of the PyTorch forward (numerical check of the kernel)."""
    tok = params["token_table"][idx]
    for l in range(N_LAYER):
        x1 = _layernorm(state, params["ln1_g"][l], params["ln1_b"][l])
        t2 = _layernorm(tok, params["ln2_g"][l], params["ln2_b"][l])
        hs = []
        for h in range(N_HEAD):
            k = t2 @ params["key_w"][l, h].T + params["key_b"][l, h]
            q = x1[:, :, None] * params["query_w"][l, h] + params["query_b"][l, h]
            wei = jnp.einsum("beh,ch->bec", q, k,
                             precision=lax.Precision.HIGHEST) * HEAD_SIZE ** -0.5
            wei = jax.nn.softmax(wei, axis=-2)
            v = jnp.tanh(t2 @ params["value_w"][l, h].T)
            out = jnp.tanh(jnp.einsum("bec,ch->beh", wei, v,
                                      precision=lax.Precision.HIGHEST))
            hs.append(out @ params["hproj_w"][l, h] + params["hproj_b"][l, h])
        cat = jnp.concatenate(hs, axis=-1)
        state = state + (cat @ params["saproj_w"][l].T + params["saproj_b"][l])
        x3 = _layernorm(state, params["ln3_g"][l], params["ln3_b"][l])
        hm = jnp.tanh(x3 @ params["ffw1_w"][l].T + params["ffw1_b"][l])
        state = state + (hm @ params["ffw2_w"][l].T + params["ffw2_b"][l])
    state = _layernorm(state, params["lnf_g"], params["lnf_b"])
    logits = state @ params["lm_w"].T + params["lm_b"]
    return state, logits


if __name__ == "__main__":
    params = init_params(0)
    packed = pack_params(params)

    T = 8
    k1, k2 = jax.random.split(jax.random.PRNGKey(0))
    state0 = 0.02 * jax.random.normal(k1, (BATCH, EMBD), dtype=jnp.float32)
    idx_seq = jax.random.randint(k2, (T, BATCH), 0, VOCAB)

    # single forward() step (module semantics)
    state1, logits1 = recurrent_transformer_forward(packed, state0, idx_seq[0])
    # full recurrent rollout: ONE pallas_call, weights stay VMEM-resident across T steps
    states, logits = recurrent_transformer_rollout(packed, state0, idx_seq)
    jax.block_until_ready((state1, logits1, states, logits))

    with jax.default_matmul_precision("highest"):
        ref_s1, ref_l1 = reference_forward(params, state0, idx_seq[0])
        ref_states, ref_logits, s = [], [], state0
        for t in range(T):
            s, lg = reference_forward(params, s, idx_seq[t])
            ref_states.append(s)
            ref_logits.append(lg)
        ref_states = jnp.stack(ref_states)
        ref_logits = jnp.stack(ref_logits)

    assert state1.shape == (BATCH, EMBD) and logits1.shape == (BATCH, VOCAB)
    assert states.shape == (T, BATCH, EMBD) and logits.shape == (T, BATCH, VOCAB)
    assert bool(jnp.all(jnp.isfinite(states))) and bool(jnp.all(jnp.isfinite(logits)))
    # bf16 MXU inputs (f32 accumulation) => a few 1e-3 of drift vs the f32 reference,
    # amplified by the final LayerNorm; keep a comfortable margin.
    TOL = dict(atol=2e-2, rtol=2e-2)
    assert jnp.allclose(state1, ref_s1, **TOL)
    assert jnp.allclose(logits1, ref_l1, **TOL)
    assert jnp.allclose(states, ref_states, **TOL)
    assert jnp.allclose(logits, ref_logits, **TOL)
    print("KERNEL_OK")
</pallas_src>

<mosaic_0001>
module attributes {stable_mosaic.version = 11 : i64} {
  func.func @_transformer_kernel(%arg0: i32, %arg1: memref<2xi32, #tpu.memory_space<smem>>, %arg2: memref<2x32xf32, #tpu.memory_space<vmem>>, %arg3: memref<16x32xf32, #tpu.memory_space<vmem>>, %arg4: memref<16x128xf32, #tpu.memory_space<vmem>>, %arg5: memref<1312x32xbf16, #tpu.memory_space<vmem>>, %arg6: memref<96x128xbf16, #tpu.memory_space<vmem>>, %arg7: memref<1x2x128xf32, #tpu.memory_space<vmem>>, %arg8: memref<2x32xf32, #tpu.memory_space<vmem>>) attributes {dimension_semantics = [#tpu.dimension_semantics<arbitrary>], iteration_bounds = array<i64: 1>, scalar_prefetch = 1 : i64, scratch_operands = 1 : i64, tpu.core_type = #tpu.core_type<tc>, window_params = [{pipeline_mode = #tpu.pipeline_mode<synchronous>, transform_indices = @transform_0, window_bounds = array<i64: 2, 32>}, {pipeline_mode = #tpu.pipeline_mode<synchronous>, transform_indices = @transform_1, window_bounds = array<i64: 16, 32>}, {pipeline_mode = #tpu.pipeline_mode<synchronous>, transform_indices = @transform_2, window_bounds = array<i64: 16, 128>}, {pipeline_mode = #tpu.pipeline_mode<synchronous>, transform_indices = @transform_3, window_bounds = array<i64: 1312, 32>}, {pipeline_mode = #tpu.pipeline_mode<synchronous>, transform_indices = @transform_4, window_bounds = array<i64: 96, 128>}, {transform_indices = @transform_5, window_bounds = array<i64: 1, 2, 128>}]} {
    %c0_i32 = arith.constant 0 : i32
    %0 = arith.cmpi eq, %arg0, %c0_i32 : i32
    %1 = arith.extui %0 : i1 to i32
    %c0_i32_0 = arith.constant 0 : i32
    %2 = arith.cmpi ne, %1, %c0_i32_0 : i32
    scf.if %2 {
      %c0_65 = arith.constant 0 : index
      %c0_66 = arith.constant 0 : index
      %366 = vector.load %arg2[%c0_65, %c0_66] : memref<2x32xf32, #tpu.memory_space<vmem>>, vector<2x32xf32>
      %c0_67 = arith.constant 0 : index
      %c0_68 = arith.constant 0 : index
      %367 = vector.load %arg8[%c0_67, %c0_68] : memref<2x32xf32, #tpu.memory_space<vmem>>, vector<2x32xf32>
      tpu.vector_store %arg8[%c0_67, %c0_68], %366 {strides = array<i32>} : memref<2x32xf32, #tpu.memory_space<vmem>>, vector<2x32xf32>,
    } else {
    }
    %c0 = arith.constant 0 : index
    %c0_1 = arith.constant 0 : index
    %3 = vector.load %arg4[%c0, %c0_1] : memref<16x128xf32, #tpu.memory_space<vmem>>, vector<16x128xf32>
    %c0_2 = arith.constant 0 : index
    %c0_3 = arith.constant 0 : index
    %4 = vector.load %arg8[%c0_2, %c0_3] : memref<2x32xf32, #tpu.memory_space<vmem>>, vector<2x32xf32>
    %c2_i32 = arith.constant 2 : i32
    %5 = arith.muli %arg0, %c2_i32 : i32
    %c0_i32_4 = arith.constant 0 : i32
    %6 = arith.addi %5, %c0_i32_4 : i32
    %7 = arith.index_cast %6 : i32 to index
    %8 = memref.load %arg1[%7] : memref<2xi32, #tpu.memory_space<smem>>
    %9 = arith.index_cast %8 : i32 to index
    %c0_5 = arith.constant 0 : index
    %10 = vector.load %arg3[%9, %c0_5] : memref<16x32xf32, #tpu.memory_space<vmem>>, vector<1x32xf32>
    %c2_i32_6 = arith.constant 2 : i32
    %11 = arith.muli %arg0, %c2_i32_6 : i32
    %c1_i32 = arith.constant 1 : i32
    %12 = arith.addi %11, %c1_i32 : i32
    %13 = arith.index_cast %12 : i32 to index
    %14 = memref.load %arg1[%13] : memref<2xi32, #tpu.memory_space<smem>>
    %15 = arith.index_cast %14 : i32 to index
    %c0_7 = arith.constant 0 : index
    %16 = vector.load %arg3[%15, %c0_7] : memref<16x32xf32, #tpu.memory_space<vmem>>, vector<1x32xf32>
    %17 = tpu.concatenate %10, %16 in 0 : vector<1x32xf32>, vector<1x32xf32> -> vector<2x32xf32>
    %cst = arith.constant dense<0.000000e+00> : vector<2xf32>
    %18 = vector.multi_reduction <add>, %17, %cst [1] : vector<2x32xf32> to vector<2xf32>
    %19 = vector.shape_cast %18 : vector<2xf32> to vector<2x1xf32>
    %cst_8 = arith.constant 3.200000e+01 : f32
    %20 = vector.broadcast %cst_8 : f32 to vector<2x1xf32>
    %21 = arith.divf %19, %20 : vector<2x1xf32>
    %22 = vector.broadcast %21 : vector<2x1xf32> to vector<2x32xf32>
    %23 = arith.subf %17, %22 : vector<2x32xf32>
    %24 = arith.mulf %23, %23 : vector<2x32xf32>
    %cst_9 = arith.constant dense<0.000000e+00> : vector<2xf32>
    %25 = vector.multi_reduction <add>, %24, %cst_9 [1] : vector<2x32xf32> to vector<2xf32>
    %26 = vector.shape_cast %25 : vector<2xf32> to vector<2x1xf32>
    %cst_10 = arith.constant 3.200000e+01 : f32
    %27 = vector.broadcast %cst_10 : f32 to vector<2x1xf32>
    %28 = arith.divf %26, %27 : vector<2x1xf32>
    %29 = vector.broadcast %21 : vector<2x1xf32> to vector<2x32xf32>
    %30 = arith.subf %17, %29 : vector<2x32xf32>
    %cst_11 = arith.constant 9.99999974E-6 : f32
    %31 = vector.broadcast %cst_11 : f32 to vector<2x1xf32>
    %32 = arith.addf %28, %31 : vector<2x1xf32>
    %33 = math.rsqrt %32 : vector<2x1xf32>
    %34 = vector.broadcast %33 : vector<2x1xf32> to vector<2x32xf32>
    %35 = arith.mulf %30, %34 : vector<2x32xf32>
    %c64 = arith.constant 64 : index
    %c0_12 = arith.constant 0 : index
    %36 = vector.load %arg6[%c64, %c0_12] : memref<96x128xbf16, #tpu.memory_space<vmem>>, vector<32x128xbf16>
    %37 = arith.truncf %35 : vector<2x32xf32> to vector<2x32xbf16>
    %cst_13 = arith.constant dense<0.000000e+00> : vector<2x128xf32>
    %38 = tpu.matmul %37, %36, %cst_13 {dimension_numbers = #tpu.dot_dimension_numbers<[1], [0], [0], [1], [0, 0, 1, 1], [], []>} : vector<2x32xbf16>, vector<32x128xbf16>, vector<2x128xf32> -> vector<2x128xf32>
    %39 = vector.extract_strided_slice %3 {offsets = [6, 0], sizes = [1, 128], strides = [1, 1]} : vector<16x128xf32> to vector<1x128xf32>
    %40 = vector.shape_cast %39 : vector<1x128xf32> to vector<128xf32>
    %41 = vector.shape_cast %40 : vector<128xf32> to vector<1x128xf32>
    %42 = vector.broadcast %41 : vector<1x128xf32> to vector<2x128xf32>
    %43 = arith.addf %38, %42 : vector<2x128xf32>
    %44 = vector.extract_strided_slice %43 {offsets = [0, 0], sizes = [2, 32], strides = [1, 1]} : vector<2x128xf32> to vector<2x32xf32>
    %45 = vector.extract_strided_slice %3 {offsets = [0, 0], sizes = [1, 32], strides = [1, 1]} : vector<16x128xf32> to vector<1x32xf32>
    %46 = vector.shape_cast %45 : vector<1x32xf32> to vector<32xf32>
    %47 = vector.extract_strided_slice %3 {offsets = [2, 0], sizes = [1, 32], strides = [1, 1]} : vector<16x128xf32> to vector<1x32xf32>
    %48 = vector.shape_cast %47 : vector<1x32xf32> to vector<32xf32>
    %cst_14 = arith.constant dense<0.000000e+00> : vector<2xf32>
    %49 = vector.multi_reduction <add>, %4, %cst_14 [1] : vector<2x32xf32> to vector<2xf32>
    %50 = vector.shape_cast %49 : vector<2xf32> to vector<2x1xf32>
    %cst_15 = arith.constant 3.200000e+01 : f32
    %51 = vector.broadcast %cst_15 : f32 to vector<2x1xf32>
    %52 = arith.divf %50, %51 : vector<2x1xf32>
    %53 = vector.broadcast %52 : vector<2x1xf32> to vector<2x32xf32>
    %54 = arith.subf %4, %53 : vector<2x32xf32>
    %55 = arith.mulf %54, %54 : vector<2x32xf32>
    %cst_16 = arith.constant dense<0.000000e+00> : vector<2xf32>
    %56 = vector.multi_reduction <add>, %55, %cst_16 [1] : vector<2x32xf32> to vector<2xf32>
    %57 = vector.shape_cast %56 : vector<2xf32> to vector<2x1xf32>
    %cst_17 = arith.constant 3.200000e+01 : f32
    %58 = vector.broadcast %cst_17 : f32 to vector<2x1xf32>
    %59 = arith.divf %57, %58 : vector<2x1xf32>
    %60 = vector.broadcast %52 : vector<2x1xf32> to vector<2x32xf32>
    %61 = arith.subf %4, %60 : vector<2x32xf32>
    %cst_18 = arith.constant 9.99999974E-6 : f32
    %62 = vector.broadcast %cst_18 : f32 to vector<2x1xf32>
    %63 = arith.addf %59, %62 : vector<2x1xf32>
    %64 = math.rsqrt %63 : vector<2x1xf32>
    %65 = vector.broadcast %64 : vector<2x1xf32> to vector<2x32xf32>
    %66 = arith.mulf %61, %65 : vector<2x32xf32>
    %67 = vector.shape_cast %46 : vector<32xf32> to vector<1x32xf32>
    %68 = vector.broadcast %67 : vector<1x32xf32> to vector<2x32xf32>
    %69 = arith.mulf %66, %68 : vector<2x32xf32>
    %70 = vector.shape_cast %48 : vector<32xf32> to vector<1x32xf32>
    %71 = vector.broadcast %70 : vector<1x32xf32> to vector<2x32xf32>
    %72 = arith.addf %69, %71 : vector<2x32xf32>
    %73 = vector.extract_strided_slice %44 {offsets = [0, 16], sizes = [2, 2], strides = [1, 1]} : vector<2x32xf32> to vector<2x2xf32>
    %74 = vector.shape_cast %72 : vector<2x32xf32> to vector<2x1x32xf32>
    %75 = vector.extract_strided_slice %73 {offsets = [0, 0], sizes = [2, 1], strides = [1, 1]} : vector<2x2xf32> to vector<2x1xf32>
    %76 = vector.shape_cast %75 : vector<2x1xf32> to vector<1x2x1xf32>
    %77 = vector.broadcast %74 : vector<2x1x32xf32> to vector<2x2x32xf32>
    %78 = vector.broadcast %76 : vector<1x2x1xf32> to vector<2x2x32xf32>
    %79 = arith.mulf %77, %78 : vector<2x2x32xf32>
    %80 = vector.shape_cast %72 : vector<2x32xf32> to vector<2x1x32xf32>
    %81 = vector.extract_strided_slice %73 {offsets = [0, 1], sizes = [2, 1], strides = [1, 1]} : vector<2x2xf32> to vector<2x1xf32>
    %82 = vector.shape_cast %81 : vector<2x1xf32> to vector<1x2x1xf32>
    %83 = vector.broadcast %80 : vector<2x1x32xf32> to vector<2x2x32xf32>
    %84 = vector.broadcast %82 : vector<1x2x1xf32> to vector<2x2x32xf32>
    %85 = arith.mulf %83, %84 : vector<2x2x32xf32>
    %86 = tpu.concatenate %79, %85 in 1 : vector<2x2x32xf32>, vector<2x2x32xf32> -> vector<2x4x32xf32>
    %cst_19 = arith.constant dense<0xFF800000> : vector<2x4xf32>
    %87 = vector.multi_reduction <maximumf>, %86, %cst_19 [2] : vector<2x4x32xf32> to vector<2x4xf32>
    %88 = vector.shape_cast %87 : vector<2x4xf32> to vector<2x4x1xf32>
    %89 = vector.broadcast %88 : vector<2x4x1xf32> to vector<2x4x32xf32>
    %90 = arith.subf %86, %89 : vector<2x4x32xf32>
    %91 = math.exp %90 : vector<2x4x32xf32>
    %cst_20 = arith.constant dense<0.000000e+00> : vector<2x4xf32>
    %92 = vector.multi_reduction <add>, %91, %cst_20 [2] : vector<2x4x32xf32> to vector<2x4xf32>
    %93 = vector.shape_cast %92 : vector<2x4xf32> to vector<2x4x1xf32>
    %94 = tpu.reciprocal %93 {approx = true} : vector<2x4x1xf32> -> vector<2x4x1xf32>
    %95 = vector.broadcast %94 : vector<2x4x1xf32> to vector<2x4x32xf32>
    %96 = arith.mulf %91, %95 : vector<2x4x32xf32>
    %97 = vector.extract_strided_slice %44 {offsets = [0, 0], sizes = [2, 16], strides = [1, 1]} : vector<2x32xf32> to vector<2x16xf32>
    %98 = math.tanh %97 : vector<2x16xf32>
    %99 = tpu.transpose %98, [1, 0] : vector<2x16xf32> -> vector<16x2xf32>
    %100 = vector.extract_strided_slice %99 {offsets = [0, 0], sizes = [8, 2], strides = [1, 1]} : vector<16x2xf32> to vector<8x2xf32>
    %101 = vector.extract_strided_slice %96 {offsets = [0, 0, 0], sizes = [2, 1, 32], strides = [1, 1, 1]} : vector<2x4x32xf32> to vector<2x1x32xf32>
    %102 = vector.shape_cast %101 : vector<2x1x32xf32> to vector<2x32xf32>
    %103 = vector.shape_cast %102 : vector<2x32xf32> to vector<2x1x32xf32>
    %104 = vector.extract_strided_slice %100 {offsets = [0, 0], sizes = [8, 1], strides = [1, 1]} : vector<8x2xf32> to vector<8x1xf32>
    %105 = vector.shape_cast %104 : vector<8x1xf32> to vector<1x8x1xf32>
    %106 = vector.broadcast %103 : vector<2x1x32xf32> to vector<2x8x32xf32>
    %107 = vector.broadcast %105 : vector<1x8x1xf32> to vector<2x8x32xf32>
    %108 = arith.mulf %106, %107 : vector<2x8x32xf32>
    %109 = vector.extract_strided_slice %96 {offsets = [0, 1, 0], sizes = [2, 1, 32], strides = [1, 1, 1]} : vector<2x4x32xf32> to vector<2x1x32xf32>
    %110 = vector.shape_cast %109 : vector<2x1x32xf32> to vector<2x32xf32>
    %111 = vector.shape_cast %110 : vector<2x32xf32> to vector<2x1x32xf32>
    %112 = vector.extract_strided_slice %100 {offsets = [0, 1], sizes = [8, 1], strides = [1, 1]} : vector<8x2xf32> to vector<8x1xf32>
    %113 = vector.shape_cast %112 : vector<8x1xf32> to vector<1x8x1xf32>
    %114 = vector.broadcast %111 : vector<2x1x32xf32> to vector<2x8x32xf32>
    %115 = vector.broadcast %113 : vector<1x8x1xf32> to vector<2x8x32xf32>
    %116 = arith.mulf %114, %115 : vector<2x8x32xf32>
    %117 = arith.addf %108, %116 : vector<2x8x32xf32>
    %118 = vector.extract_strided_slice %99 {offsets = [8, 0], sizes = [8, 2], strides = [1, 1]} : vector<16x2xf32> to vector<8x2xf32>
    %119 = vector.extract_strided_slice %96 {offsets = [0, 2, 0], sizes = [2, 1, 32], strides = [1, 1, 1]} : vector<2x4x32xf32> to vector<2x1x32xf32>
    %120 = vector.shape_cast %119 : vector<2x1x32xf32> to vector<2x32xf32>
    %121 = vector.shape_cast %120 : vector<2x32xf32> to vector<2x1x32xf32>
    %122 = vector.extract_strided_slice %118 {offsets = [0, 0], sizes = [8, 1], strides = [1, 1]} : vector<8x2xf32> to vector<8x1xf32>
    %123 = vector.shape_cast %122 : vector<8x1xf32> to vector<1x8x1xf32>
    %124 = vector.broadcast %121 : vector<2x1x32xf32> to vector<2x8x32xf32>
    %125 = vector.broadcast %123 : vector<1x8x1xf32> to vector<2x8x32xf32>
    %126 = arith.mulf %124, %125 : vector<2x8x32xf32>
    %127 = vector.extract_strided_slice %96 {offsets = [0, 3, 0], sizes = [2, 1, 32], strides = [1, 1, 1]} : vector<2x4x32xf32> to vector<2x1x32xf32>
    %128 = vector.shape_cast %127 : vector<2x1x32xf32> to vector<2x32xf32>
    %129 = vector.shape_cast %128 : vector<2x32xf32> to vector<2x1x32xf32>
    %130 = vector.extract_strided_slice %118 {offsets = [0, 1], sizes = [8, 1], strides = [1, 1]} : vector<8x2xf32> to vector<8x1xf32>
    %131 = vector.shape_cast %130 : vector<8x1xf32> to vector<1x8x1xf32>
    %132 = vector.broadcast %129 : vector<2x1x32xf32> to vector<2x8x32xf32>
    %133 = vector.broadcast %131 : vector<1x8x1xf32> to vector<2x8x32xf32>
    %134 = arith.mulf %132, %133 : vector<2x8x32xf32>
    %135 = arith.addf %126, %134 : vector<2x8x32xf32>
    %136 = tpu.concatenate %117, %135 in 1 : vector<2x8x32xf32>, vector<2x8x32xf32> -> vector<2x16x32xf32>
    %137 = math.tanh %136 : vector<2x16x32xf32>
    %138 = vector.shape_cast %137 : vector<2x16x32xf32> to vector<2x512xf32>
    %c0_21 = arith.constant 0 : index
    %c0_22 = arith.constant 0 : index
    %139 = vector.load %arg5[%c0_21, %c0_22] : memref<1312x32xbf16, #tpu.memory_space<vmem>>, vector<512x32xbf16>
    %140 = arith.truncf %138 : vector<2x512xf32> to vector<2x512xbf16>
    %cst_23 = arith.constant dense<0.000000e+00> : vector<2x32xf32>
    %141 = tpu.matmul %140, %139, %cst_23 {dimension_numbers = #tpu.dot_dimension_numbers<[1], [0], [0], [1], [0, 0, 1, 1], [], []>} : vector<2x512xbf16>, vector<512x32xbf16>, vector<2x32xf32> -> vector<2x32xf32>
    %142 = vector.extract_strided_slice %3 {offsets = [7, 0], sizes = [1, 32], strides = [1, 1]} : vector<16x128xf32> to vector<1x32xf32>
    %143 = vector.shape_cast %142 : vector<1x32xf32> to vector<32xf32>
    %144 = vector.shape_cast %143 : vector<32xf32> to vector<1x32xf32>
    %145 = vector.broadcast %144 : vector<1x32xf32> to vector<2x32xf32>
    %146 = arith.addf %141, %145 : vector<2x32xf32>
    %147 = arith.addf %4, %146 : vector<2x32xf32>
    %cst_24 = arith.constant dense<0.000000e+00> : vector<2xf32>
    %148 = vector.multi_reduction <add>, %147, %cst_24 [1] : vector<2x32xf32> to vector<2xf32>
    %149 = vector.shape_cast %148 : vector<2xf32> to vector<2x1xf32>
    %cst_25 = arith.constant 3.200000e+01 : f32
    %150 = vector.broadcast %cst_25 : f32 to vector<2x1xf32>
    %151 = arith.divf %149, %150 : vector<2x1xf32>
    %152 = vector.broadcast %151 : vector<2x1xf32> to vector<2x32xf32>
    %153 = arith.subf %147, %152 : vector<2x32xf32>
    %154 = arith.mulf %153, %153 : vector<2x32xf32>
    %cst_26 = arith.constant dense<0.000000e+00> : vector<2xf32>
    %155 = vector.multi_reduction <add>, %154, %cst_26 [1] : vector<2x32xf32> to vector<2xf32>
    %156 = vector.shape_cast %155 : vector<2xf32> to vector<2x1xf32>
    %cst_27 = arith.constant 3.200000e+01 : f32
    %157 = vector.broadcast %cst_27 : f32 to vector<2x1xf32>
    %158 = arith.divf %156, %157 : vector<2x1xf32>
    %159 = vector.broadcast %151 : vector<2x1xf32> to vector<2x32xf32>
    %160 = arith.subf %147, %159 : vector<2x32xf32>
    %cst_28 = arith.constant 9.99999974E-6 : f32
    %161 = vector.broadcast %cst_28 : f32 to vector<2x1xf32>
    %162 = arith.addf %158, %161 : vector<2x1xf32>
    %163 = math.rsqrt %162 : vector<2x1xf32>
    %164 = vector.broadcast %163 : vector<2x1xf32> to vector<2x32xf32>
    %165 = arith.mulf %160, %164 : vector<2x32xf32>
    %c0_29 = arith.constant 0 : index
    %c0_30 = arith.constant 0 : index
    %166 = vector.load %arg6[%c0_29, %c0_30] : memref<96x128xbf16, #tpu.memory_space<vmem>>, vector<32x128xbf16>
    %167 = arith.truncf %165 : vector<2x32xf32> to vector<2x32xbf16>
    %cst_31 = arith.constant dense<0.000000e+00> : vector<2x128xf32>
    %168 = tpu.matmul %167, %166, %cst_31 {dimension_numbers = #tpu.dot_dimension_numbers<[1], [0], [0], [1], [0, 0, 1, 1], [], []>} : vector<2x32xbf16>, vector<32x128xbf16>, vector<2x128xf32> -> vector<2x128xf32>
    %169 = vector.extract_strided_slice %3 {offsets = [9, 0], sizes = [1, 128], strides = [1, 1]} : vector<16x128xf32> to vector<1x128xf32>
    %170 = vector.shape_cast %169 : vector<1x128xf32> to vector<128xf32>
    %171 = vector.shape_cast %170 : vector<128xf32> to vector<1x128xf32>
    %172 = vector.broadcast %171 : vector<1x128xf32> to vector<2x128xf32>
    %173 = arith.addf %168, %172 : vector<2x128xf32>
    %174 = math.tanh %173 : vector<2x128xf32>
    %c1024 = arith.constant 1024 : index
    %c0_32 = arith.constant 0 : index
    %175 = vector.load %arg5[%c1024, %c0_32] : memref<1312x32xbf16, #tpu.memory_space<vmem>>, vector<128x32xbf16>
    %176 = arith.truncf %174 : vector<2x128xf32> to vector<2x128xbf16>
    %cst_33 = arith.constant dense<0.000000e+00> : vector<2x32xf32>
    %177 = tpu.matmul %176, %175, %cst_33 {dimension_numbers = #tpu.dot_dimension_numbers<[1], [0], [0], [1], [0, 0, 1, 1], [], []>} : vector<2x128xbf16>, vector<128x32xbf16>, vector<2x32xf32> -> vector<2x32xf32>
    %178 = arith.addf %147, %177 : vector<2x32xf32>
    %179 = vector.extract_strided_slice %3 {offsets = [11, 0], sizes = [1, 32], strides = [1, 1]} : vector<16x128xf32> to vector<1x32xf32>
    %180 = vector.shape_cast %179 : vector<1x32xf32> to vector<32xf32>
    %181 = vector.shape_cast %180 : vector<32xf32> to vector<1x32xf32>
    %182 = vector.broadcast %181 : vector<1x32xf32> to vector<2x32xf32>
    %183 = arith.addf %178, %182 : vector<2x32xf32>
    %184 = vector.extract_strided_slice %43 {offsets = [0, 32], sizes = [2, 32], strides = [1, 1]} : vector<2x128xf32> to vector<2x32xf32>
    %185 = vector.extract_strided_slice %3 {offsets = [1, 0], sizes = [1, 32], strides = [1, 1]} : vector<16x128xf32> to vector<1x32xf32>
    %186 = vector.shape_cast %185 : vector<1x32xf32> to vector<32xf32>
    %187 = vector.extract_strided_slice %3 {offsets = [3, 0], sizes = [1, 32], strides = [1, 1]} : vector<16x128xf32> to vector<1x32xf32>
    %188 = vector.shape_cast %187 : vector<1x32xf32> to vector<32xf32>
    %cst_34 = arith.constant dense<0.000000e+00> : vector<2xf32>
    %189 = vector.multi_reduction <add>, %183, %cst_34 [1] : vector<2x32xf32> to vector<2xf32>
    %190 = vector.shape_cast %189 : vector<2xf32> to vector<2x1xf32>
    %cst_35 = arith.constant 3.200000e+01 : f32
    %191 = vector.broadcast %cst_35 : f32 to vector<2x1xf32>
    %192 = arith.divf %190, %191 : vector<2x1xf32>
    %193 = vector.broadcast %192 : vector<2x1xf32> to vector<2x32xf32>
    %194 = arith.subf %183, %193 : vector<2x32xf32>
    %195 = arith.mulf %194, %194 : vector<2x32xf32>
    %cst_36 = arith.constant dense<0.000000e+00> : vector<2xf32>
    %196 = vector.multi_reduction <add>, %195, %cst_36 [1] : vector<2x32xf32> to vector<2xf32>
    %197 = vector.shape_cast %196 : vector<2xf32> to vector<2x1xf32>
    %cst_37 = arith.constant 3.200000e+01 : f32
    %198 = vector.broadcast %cst_37 : f32 to vector<2x1xf32>
    %199 = arith.divf %197, %198 : vector<2x1xf32>
    %200 = vector.broadcast %192 : vector<2x1xf32> to vector<2x32xf32>
    %201 = arith.subf %183, %200 : vector<2x32xf32>
    %cst_38 = arith.constant 9.99999974E-6 : f32
    %202 = vector.broadcast %cst_38 : f32 to vector<2x1xf32>
    %203 = arith.addf %199, %202 : vector<2x1xf32>
    %204 = math.rsqrt %203 : vector<2x1xf32>
    %205 = vector.broadcast %204 : vector<2x1xf32> to vector<2x32xf32>
    %206 = arith.mulf %201, %205 : vector<2x32xf32>
    %207 = vector.shape_cast %186 : vector<32xf32> to vector<1x32xf32>
    %208 = vector.broadcast %207 : vector<1x32xf32> to vector<2x32xf32>
    %209 = arith.mulf %206, %208 : vector<2x32xf32>
    %210 = vector.shape_cast %188 : vector<32xf32> to vector<1x32xf32>
    %211 = vector.broadcast %210 : vector<1x32xf32> to vector<2x32xf32>
    %212 = arith.addf %209, %211 : vector<2x32xf32>
    %213 = vector.extract_strided_slice %184 {offsets = [0, 16], sizes = [2, 2], strides = [1, 1]} : vector<2x32xf32> to vector<2x2xf32>
    %214 = vector.shape_cast %212 : vector<2x32xf32> to vector<2x1x32xf32>
    %215 = vector.extract_strided_slice %213 {offsets = [0, 0], sizes = [2, 1], strides = [1, 1]} : vector<2x2xf32> to vector<2x1xf32>
    %216 = vector.shape_cast %215 : vector<2x1xf32> to vector<1x2x1xf32>
    %217 = vector.broadcast %214 : vector<2x1x32xf32> to vector<2x2x32xf32>
    %218 = vector.broadcast %216 : vector<1x2x1xf32> to vector<2x2x32xf32>
    %219 = arith.mulf %217, %218 : vector<2x2x32xf32>
    %220 = vector.shape_cast %212 : vector<2x32xf32> to vector<2x1x32xf32>
    %221 = vector.extract_strided_slice %213 {offsets = [0, 1], sizes = [2, 1], strides = [1, 1]} : vector<2x2xf32> to vector<2x1xf32>
    %222 = vector.shape_cast %221 : vector<2x1xf32> to vector<1x2x1xf32>
    %223 = vector.broadcast %220 : vector<2x1x32xf32> to vector<2x2x32xf32>
    %224 = vector.broadcast %222 : vector<1x2x1xf32> to vector<2x2x32xf32>
    %225 = arith.mulf %223, %224 : vector<2x2x32xf32>
    %226 = tpu.concatenate %219, %225 in 1 : vector<2x2x32xf32>, vector<2x2x32xf32> -> vector<2x4x32xf32>
    %cst_39 = arith.constant dense<0xFF800000> : vector<2x4xf32>
    %227 = vector.multi_reduction <maximumf>, %226, %cst_39 [2] : vector<2x4x32xf32> to vector<2x4xf32>
    %228 = vector.shape_cast %227 : vector<2x4xf32> to vector<2x4x1xf32>
    %229 = vector.broadcast %228 : vector<2x4x1xf32> to vector<2x4x32xf32>
    %230 = arith.subf %226, %229 : vector<2x4x32xf32>
    %231 = math.exp %230 : vector<2x4x32xf32>
    %cst_40 = arith.constant dense<0.000000e+00> : vector<2x4xf32>
    %232 = vector.multi_reduction <add>, %231, %cst_40 [2] : vector<2x4x32xf32> to vector<2x4xf32>
    %233 = vector.shape_cast %232 : vector<2x4xf32> to vector<2x4x1xf32>
    %234 = tpu.reciprocal %233 {approx = true} : vector<2x4x1xf32> -> vector<2x4x1xf32>
    %235 = vector.broadcast %234 : vector<2x4x1xf32> to vector<2x4x32xf32>
    %236 = arith.mulf %231, %235 : vector<2x4x32xf32>
    %237 = vector.extract_strided_slice %184 {offsets = [0, 0], sizes = [2, 16], strides = [1, 1]} : vector<2x32xf32> to vector<2x16xf32>
    %238 = math.tanh %237 : vector<2x16xf32>
    %239 = tpu.transpose %238, [1, 0] : vector<2x16xf32> -> vector<16x2xf32>
    %240 = vector.extract_strided_slice %239 {offsets = [0, 0], sizes = [8, 2], strides = [1, 1]} : vector<16x2xf32> to vector<8x2xf32>
    %241 = vector.extract_strided_slice %236 {offsets = [0, 0, 0], sizes = [2, 1, 32], strides = [1, 1, 1]} : vector<2x4x32xf32> to vector<2x1x32xf32>
    %242 = vector.shape_cast %241 : vector<2x1x32xf32> to vector<2x32xf32>
    %243 = vector.shape_cast %242 : vector<2x32xf32> to vector<2x1x32xf32>
    %244 = vector.extract_strided_slice %240 {offsets = [0, 0], sizes = [8, 1], strides = [1, 1]} : vector<8x2xf32> to vector<8x1xf32>
    %245 = vector.shape_cast %244 : vector<8x1xf32> to vector<1x8x1xf32>
    %246 = vector.broadcast %243 : vector<2x1x32xf32> to vector<2x8x32xf32>
    %247 = vector.broadcast %245 : vector<1x8x1xf32> to vector<2x8x32xf32>
    %248 = arith.mulf %246, %247 : vector<2x8x32xf32>
    %249 = vector.extract_strided_slice %236 {offsets = [0, 1, 0], sizes = [2, 1, 32], strides = [1, 1, 1]} : vector<2x4x32xf32> to vector<2x1x32xf32>
    %250 = vector.shape_cast %249 : vector<2x1x32xf32> to vector<2x32xf32>
    %251 = vector.shape_cast %250 : vector<2x32xf32> to vector<2x1x32xf32>
    %252 = vector.extract_strided_slice %240 {offsets = [0, 1], sizes = [8, 1], strides = [1, 1]} : vector<8x2xf32> to vector<8x1xf32>
    %253 = vector.shape_cast %252 : vector<8x1xf32> to vector<1x8x1xf32>
    %254 = vector.broadcast %251 : vector<2x1x32xf32> to vector<2x8x32xf32>
    %255 = vector.broadcast %253 : vector<1x8x1xf32> to vector<2x8x32xf32>
    %256 = arith.mulf %254, %255 : vector<2x8x32xf32>
    %257 = arith.addf %248, %256 : vector<2x8x32xf32>
    %258 = vector.extract_strided_slice %239 {offsets = [8, 0], sizes = [8, 2], strides = [1, 1]} : vector<16x2xf32> to vector<8x2xf32>
    %259 = vector.extract_strided_slice %236 {offsets = [0, 2, 0], sizes = [2, 1, 32], strides = [1, 1, 1]} : vector<2x4x32xf32> to vector<2x1x32xf32>
    %260 = vector.shape_cast %259 : vector<2x1x32xf32> to vector<2x32xf32>
    %261 = vector.shape_cast %260 : vector<2x32xf32> to vector<2x1x32xf32>
    %262 = vector.extract_strided_slice %258 {offsets = [0, 0], sizes = [8, 1], strides = [1, 1]} : vector<8x2xf32> to vector<8x1xf32>
    %263 = vector.shape_cast %262 : vector<8x1xf32> to vector<1x8x1xf32>
    %264 = vector.broadcast %261 : vector<2x1x32xf32> to vector<2x8x32xf32>
    %265 = vector.broadcast %263 : vector<1x8x1xf32> to vector<2x8x32xf32>
    %266 = arith.mulf %264, %265 : vector<2x8x32xf32>
    %267 = vector.extract_strided_slice %236 {offsets = [0, 3, 0], sizes = [2, 1, 32], strides = [1, 1, 1]} : vector<2x4x32xf32> to vector<2x1x32xf32>
    %268 = vector.shape_cast %267 : vector<2x1x32xf32> to vector<2x32xf32>
    %269 = vector.shape_cast %268 : vector<2x32xf32> to vector<2x1x32xf32>
    %270 = vector.extract_strided_slice %258 {offsets = [0, 1], sizes = [8, 1], strides = [1, 1]} : vector<8x2xf32> to vector<8x1xf32>
    %271 = vector.shape_cast %270 : vector<8x1xf32> to vector<1x8x1xf32>
    %272 = vector.broadcast %269 : vector<2x1x32xf32> to vector<2x8x32xf32>
    %273 = vector.broadcast %271 : vector<1x8x1xf32> to vector<2x8x32xf32>
    %274 = arith.mulf %272, %273 : vector<2x8x32xf32>
    %275 = arith.addf %266, %274 : vector<2x8x32xf32>
    %276 = tpu.concatenate %257, %275 in 1 : vector<2x8x32xf32>, vector<2x8x32xf32> -> vector<2x16x32xf32>
    %277 = math.tanh %276 : vector<2x16x32xf32>
    %278 = vector.shape_cast %277 : vector<2x16x32xf32> to vector<2x512xf32>
    %c512 = arith.constant 512 : index
    %c0_41 = arith.constant 0 : index
    %279 = vector.load %arg5[%c512, %c0_41] : memref<1312x32xbf16, #tpu.memory_space<vmem>>, vector<512x32xbf16>
    %280 = arith.truncf %278 : vector<2x512xf32> to vector<2x512xbf16>
    %cst_42 = arith.constant dense<0.000000e+00> : vector<2x32xf32>
    %281 = tpu.matmul %280, %279, %cst_42 {dimension_numbers = #tpu.dot_dimension_numbers<[1], [0], [0], [1], [0, 0, 1, 1], [], []>} : vector<2x512xbf16>, vector<512x32xbf16>, vector<2x32xf32> -> vector<2x32xf32>
    %282 = vector.extract_strided_slice %3 {offsets = [8, 0], sizes = [1, 32], strides = [1, 1]} : vector<16x128xf32> to vector<1x32xf32>
    %283 = vector.shape_cast %282 : vector<1x32xf32> to vector<32xf32>
    %284 = vector.shape_cast %283 : vector<32xf32> to vector<1x32xf32>
    %285 = vector.broadcast %284 : vector<1x32xf32> to vector<2x32xf32>
    %286 = arith.addf %281, %285 : vector<2x32xf32>
    %287 = arith.addf %183, %286 : vector<2x32xf32>
    %cst_43 = arith.constant dense<0.000000e+00> : vector<2xf32>
    %288 = vector.multi_reduction <add>, %287, %cst_43 [1] : vector<2x32xf32> to vector<2xf32>
    %289 = vector.shape_cast %288 : vector<2xf32> to vector<2x1xf32>
    %cst_44 = arith.constant 3.200000e+01 : f32
    %290 = vector.broadcast %cst_44 : f32 to vector<2x1xf32>
    %291 = arith.divf %289, %290 : vector<2x1xf32>
    %292 = vector.broadcast %291 : vector<2x1xf32> to vector<2x32xf32>
    %293 = arith.subf %287, %292 : vector<2x32xf32>
    %294 = arith.mulf %293, %293 : vector<2x32xf32>
    %cst_45 = arith.constant dense<0.000000e+00> : vector<2xf32>
    %295 = vector.multi_reduction <add>, %294, %cst_45 [1] : vector<2x32xf32> to vector<2xf32>
    %296 = vector.shape_cast %295 : vector<2xf32> to vector<2x1xf32>
    %cst_46 = arith.constant 3.200000e+01 : f32
    %297 = vector.broadcast %cst_46 : f32 to vector<2x1xf32>
    %298 = arith.divf %296, %297 : vector<2x1xf32>
    %299 = vector.broadcast %291 : vector<2x1xf32> to vector<2x32xf32>
    %300 = arith.subf %287, %299 : vector<2x32xf32>
    %cst_47 = arith.constant 9.99999974E-6 : f32
    %301 = vector.broadcast %cst_47 : f32 to vector<2x1xf32>
    %302 = arith.addf %298, %301 : vector<2x1xf32>
    %303 = math.rsqrt %302 : vector<2x1xf32>
    %304 = vector.broadcast %303 : vector<2x1xf32> to vector<2x32xf32>
    %305 = arith.mulf %300, %304 : vector<2x32xf32>
    %c32 = arith.constant 32 : index
    %c0_48 = arith.constant 0 : index
    %306 = vector.load %arg6[%c32, %c0_48] : memref<96x128xbf16, #tpu.memory_space<vmem>>, vector<32x128xbf16>
    %307 = arith.truncf %305 : vector<2x32xf32> to vector<2x32xbf16>
    %cst_49 = arith.constant dense<0.000000e+00> : vector<2x128xf32>
    %308 = tpu.matmul %307, %306, %cst_49 {dimension_numbers = #tpu.dot_dimension_numbers<[1], [0], [0], [1], [0, 0, 1, 1], [], []>} : vector<2x32xbf16>, vector<32x128xbf16>, vector<2x128xf32> -> vector<2x128xf32>
    %309 = vector.extract_strided_slice %3 {offsets = [10, 0], sizes = [1, 128], strides = [1, 1]} : vector<16x128xf32> to vector<1x128xf32>
    %310 = vector.shape_cast %309 : vector<1x128xf32> to vector<128xf32>
    %311 = vector.shape_cast %310 : vector<128xf32> to vector<1x128xf32>
    %312 = vector.broadcast %311 : vector<1x128xf32> to vector<2x128xf32>
    %313 = arith.addf %308, %312 : vector<2x128xf32>
    %314 = math.tanh %313 : vector<2x128xf32>
    %c1152 = arith.constant 1152 : index
    %c0_50 = arith.constant 0 : index
    %315 = vector.load %arg5[%c1152, %c0_50] : memref<1312x32xbf16, #tpu.memory_space<vmem>>, vector<128x32xbf16>
    %316 = arith.truncf %314 : vector<2x128xf32> to vector<2x128xbf16>
    %cst_51 = arith.constant dense<0.000000e+00> : vector<2x32xf32>
    %317 = tpu.matmul %316, %315, %cst_51 {dimension_numbers = #tpu.dot_dimension_numbers<[1], [0], [0], [1], [0, 0, 1, 1], [], []>} : vector<2x128xbf16>, vector<128x32xbf16>, vector<2x32xf32> -> vector<2x32xf32>
    %318 = arith.addf %287, %317 : vector<2x32xf32>
    %319 = vector.extract_strided_slice %3 {offsets = [12, 0], sizes = [1, 32], strides = [1, 1]} : vector<16x128xf32> to vector<1x32xf32>
    %320 = vector.shape_cast %319 : vector<1x32xf32> to vector<32xf32>
    %321 = vector.shape_cast %320 : vector<32xf32> to vector<1x32xf32>
    %322 = vector.broadcast %321 : vector<1x32xf32> to vector<2x32xf32>
    %323 = arith.addf %318, %322 : vector<2x32xf32>
    %324 = vector.extract_strided_slice %3 {offsets = [4, 0], sizes = [1, 32], strides = [1, 1]} : vector<16x128xf32> to vector<1x32xf32>
    %325 = vector.shape_cast %324 : vector<1x32xf32> to vector<32xf32>
    %326 = vector.extract_strided_slice %3 {offsets = [5, 0], sizes = [1, 32], strides = [1, 1]} : vector<16x128xf32> to vector<1x32xf32>
    %327 = vector.shape_cast %326 : vector<1x32xf32> to vector<32xf32>
    %cst_52 = arith.constant dense<0.000000e+00> : vector<2xf32>
    %328 = vector.multi_reduction <add>, %323, %cst_52 [1] : vector<2x32xf32> to vector<2xf32>
    %329 = vector.shape_cast %328 : vector<2xf32> to vector<2x1xf32>
    %cst_53 = arith.constant 3.200000e+01 : f32
    %330 = vector.broadcast %cst_53 : f32 to vector<2x1xf32>
    %331 = arith.divf %329, %330 : vector<2x1xf32>
    %332 = vector.broadcast %331 : vector<2x1xf32> to vector<2x32xf32>
    %333 = arith.subf %323, %332 : vector<2x32xf32>
    %334 = arith.mulf %333, %333 : vector<2x32xf32>
    %cst_54 = arith.constant dense<0.000000e+00> : vector<2xf32>
    %335 = vector.multi_reduction <add>, %334, %cst_54 [1] : vector<2x32xf32> to vector<2xf32>
    %336 = vector.shape_cast %335 : vector<2xf32> to vector<2x1xf32>
    %cst_55 = arith.constant 3.200000e+01 : f32
    %337 = vector.broadcast %cst_55 : f32 to vector<2x1xf32>
    %338 = arith.divf %336, %337 : vector<2x1xf32>
    %339 = vector.broadcast %331 : vector<2x1xf32> to vector<2x32xf32>
    %340 = arith.subf %323, %339 : vector<2x32xf32>
    %cst_56 = arith.constant 9.99999974E-6 : f32
    %341 = vector.broadcast %cst_56 : f32 to vector<2x1xf32>
    %342 = arith.addf %338, %341 : vector<2x1xf32>
    %343 = math.rsqrt %342 : vector<2x1xf32>
    %344 = vector.broadcast %343 : vector<2x1xf32> to vector<2x32xf32>
    %345 = arith.mulf %340, %344 : vector<2x32xf32>
    %346 = vector.shape_cast %325 : vector<32xf32> to vector<1x32xf32>
    %347 = vector.broadcast %346 : vector<1x32xf32> to vector<2x32xf32>
    %348 = arith.mulf %345, %347 : vector<2x32xf32>
    %349 = vector.shape_cast %327 : vector<32xf32> to vector<1x32xf32>
    %350 = vector.broadcast %349 : vector<1x32xf32> to vector<2x32xf32>
    %351 = arith.addf %348, %350 : vector<2x32xf32>
    %c1280 = arith.constant 1280 : index
    %c0_57 = arith.constant 0 : index
    %352 = vector.load %arg5[%c1280, %c0_57] : memref<1312x32xbf16, #tpu.memory_space<vmem>>, vector<32x32xbf16>
    %353 = arith.truncf %351 : vector<2x32xf32> to vector<2x32xbf16>
    %cst_58 = arith.constant dense<0.000000e+00> : vector<2x32xf32>
    %354 = tpu.matmul %353, %352, %cst_58 {dimension_numbers = #tpu.dot_dimension_numbers<[1], [0], [0], [1], [0, 0, 1, 1], [], []>} : vector<2x32xbf16>, vector<32x32xbf16>, vector<2x32xf32> -> vector<2x32xf32>
    %355 = vector.extract_strided_slice %3 {offsets = [13, 0], sizes = [1, 32], strides = [1, 1]} : vector<16x128xf32> to vector<1x32xf32>
    %356 = vector.shape_cast %355 : vector<1x32xf32> to vector<32xf32>
    %357 = vector.shape_cast %356 : vector<32xf32> to vector<1x32xf32>
    %358 = vector.broadcast %357 : vector<1x32xf32> to vector<2x32xf32>
    %359 = arith.addf %354, %358 : vector<2x32xf32>
    %c0_59 = arith.constant 0 : index
    %c0_60 = arith.constant 0 : index
    %360 = vector.load %arg8[%c0_59, %c0_60] : memref<2x32xf32, #tpu.memory_space<vmem>>, vector<2x32xf32>
    tpu.vector_store %arg8[%c0_59, %c0_60], %351 {strides = array<i32>} : memref<2x32xf32, #tpu.memory_space<vmem>>, vector<2x32xf32>,
    %cst_61 = arith.constant 0.000000e+00 : f32
    %361 = vector.broadcast %cst_61 : f32 to vector<2x64xf32>
    %362 = tpu.concatenate %351, %359, %361 in 1 : vector<2x32xf32>, vector<2x32xf32>, vector<2x64xf32> -> vector<2x128xf32>
    %c0_62 = arith.constant 0 : index
    %c0_63 = arith.constant 0 : index
    %c0_64 = arith.constant 0 : index
    %363 = vector.load %arg7[%c0_62, %c0_63, %c0_64] : memref<1x2x128xf32, #tpu.memory_space<vmem>>, vector<1x2x128xf32>
    %364 = vector.shape_cast %363 : vector<1x2x128xf32> to vector<2x128xf32>
    %365 = vector.shape_cast %362 : vector<2x128xf32> to vector<1x2x128xf32>
    tpu.vector_store %arg7[%c0_62, %c0_63, %c0_64], %365 {strides = array<i32>} : memref<1x2x128xf32, #tpu.memory_space<vmem>>, vector<1x2x128xf32>,
    return
  }
  func.func @transform_0(%arg0: i32, %arg1: memref<2xi32, #tpu.memory_space<smem>>) -> (i32, i32) {
    %c0_i32 = arith.constant 0 : i32
    %c0_i32_0 = arith.constant 0 : i32
    %c0_i32_1 = arith.constant 0 : i32
    return %c0_i32, %c0_i32_0 : i32, i32
  }
  func.func @transform_1(%arg0: i32, %arg1: memref<2xi32, #tpu.memory_space<smem>>) -> (i32, i32) {
    %c0_i32 = arith.constant 0 : i32
    %c0_i32_0 = arith.constant 0 : i32
    %c0_i32_1 = arith.constant 0 : i32
    return %c0_i32, %c0_i32_0 : i32, i32
  }
  func.func @transform_2(%arg0: i32, %arg1: memref<2xi32, #tpu.memory_space<smem>>) -> (i32, i32) {
    %c0_i32 = arith.constant 0 : i32
    %c0_i32_0 = arith.constant 0 : i32
    %c0_i32_1 = arith.constant 0 : i32
    return %c0_i32, %c0_i32_0 : i32, i32
  }
  func.func @transform_3(%arg0: i32, %arg1: memref<2xi32, #tpu.memory_space<smem>>) -> (i32, i32) {
    %c0_i32 = arith.constant 0 : i32
    %c0_i32_0 = arith.constant 0 : i32
    %c0_i32_1 = arith.constant 0 : i32
    return %c0_i32, %c0_i32_0 : i32, i32
  }
  func.func @transform_4(%arg0: i32, %arg1: memref<2xi32, #tpu.memory_space<smem>>) -> (i32, i32) {
    %c0_i32 = arith.constant 0 : i32
    %c0_i32_0 = arith.constant 0 : i32
    %c0_i32_1 = arith.constant 0 : i32
    return %c0_i32, %c0_i32_0 : i32, i32
  }
  func.func @transform_5(%arg0: i32, %arg1: memref<2xi32, #tpu.memory_space<smem>>) -> (i32, i32, i32) {
    %c0_i32 = arith.constant 0 : i32
    %c0_i32_0 = arith.constant 0 : i32
    %c0_i32_1 = arith.constant 0 : i32
    return %arg0, %c0_i32, %c0_i32_0 : i32, i32, i32
  }
}

</mosaic_0001>

<llo_original>
// kernel: recurrent_transformer_rollout.1
$region0: #{recurrent_transformer_rollout.1}
  #allocation0 [shape = 'u32[]', space=smem, size = 0x4, offset = 0x4, fixed_abs, tag = 'smem constant byte address 0x4 - core index']
  #allocation1 [shape = 'u32[144,128]{1,0:T(1,128)}', space=vmem, size = 0x12000, scoped, tag = 'internal scratch']
  #allocation2 [shape = 'f32[2,32]{1,0:T(2,128)}', space=vmem, size = 0x400, scoped, tag = 'scratch operand']
  #allocation3 [shape = 's32[1]{0}', space=sflag, size = 0x4, scoped, tag = 'scoped memory for recurrent_transformer_rollout.1']
  #allocation4 [shape = 'u8[512]{0}', space=smem, size = 0x200, scoped, tag = 'prefetched SMEM operand 0']
  %s0 = inlined_call_operand.vmem [shape: s32[2], index: 0, kind: input, shape index: {}]
  %s1 = inlined_call_operand.vmem [shape: f32[2,32], index: 1, kind: input, shape index: {}]
  %s2 = inlined_call_operand.vmem [shape: f32[16,32], index: 2, kind: input, shape index: {}]
  %s3 = inlined_call_operand.vmem [shape: f32[16,128], index: 3, kind: input, shape index: {}]
  %s4 = inlined_call_operand.vmem [shape: bf16[1312,32], index: 4, kind: input, shape index: {}]
  %s5 = inlined_call_operand.vmem [shape: bf16[96,128], index: 5, kind: input, shape index: {}]
  %s6 = inlined_call_operand.vmem [shape: f32[1,2,128], index: 6, kind: output, shape index: {}]
  %s7 = sld [smem:[#allocation0]]
  $region34: #{recurrent_transformer_rollout.1} parent=0
    _
  %s9 = ssub.s32 1, %s7
  %s10 = scalar_select 0, %s9, %s7
  %s11 = sshll.u32 %s0, 4
  %s12 = int_to_ptr.vmem [resolvable:$true] %s11
  %14 = dma.vmem_to_smem %s12, 16, [#allocation4], [#allocation3]
  %15 = dma.done [#allocation3], 16
  %16 = sfence
  // Predicated region
  $region2: #{recurrent_transformer_rollout.1} parent=0 // pred_check
    _
  $region3: #{recurrent_transformer_rollout.1} parent=0 // pred_check_branch
    %18 = sbr.rel (0) target = $region5
  $region4: #{recurrent_transformer_rollout.1} parent=0 // pred_region
    _
  $region5: #{recurrent_transformer_rollout.1} parent=0 // pred_fallthru
    _
  // Predicated region
  $region6: #{recurrent_transformer_rollout.1} parent=0 // pred_check
    _
  $region7: #{recurrent_transformer_rollout.1} parent=0 // pred_check_branch
    %20 = sbr.rel (0) target = $region9
  $region8: #{recurrent_transformer_rollout.1} parent=0 // pred_region
    _
  $region9: #{recurrent_transformer_rollout.1} parent=0 // pred_fallthru
    _
  // Predicated region
  $region10: #{recurrent_transformer_rollout.1} parent=0 // pred_check
    _
  $region11: #{recurrent_transformer_rollout.1} parent=0 // pred_check_branch
    %22 = sbr.rel (0) target = $region13
  $region12: #{recurrent_transformer_rollout.1} parent=0 // pred_region
    _
  $region13: #{recurrent_transformer_rollout.1} parent=0 // pred_fallthru
    _
  // Predicated region
  $region14: #{recurrent_transformer_rollout.1} parent=0 // pred_check
    _
  $region15: #{recurrent_transformer_rollout.1} parent=0 // pred_check_branch
    %24 = sbr.rel (0) target = $region17
  $region16: #{recurrent_transformer_rollout.1} parent=0 // pred_region
    _
  $region17: #{recurrent_transformer_rollout.1} parent=0 // pred_fallthru
    _
  // Predicated region
  $region18: #{recurrent_transformer_rollout.1} parent=0 // pred_check
    _
  $region19: #{recurrent_transformer_rollout.1} parent=0 // pred_check_branch
    %26 = sbr.rel (0) target = $region21
  $region20: #{recurrent_transformer_rollout.1} parent=0 // pred_region
    _
  $region21: #{recurrent_transformer_rollout.1} parent=0 // pred_fallthru
    _
  %p28 = scmp.eq.s32.totalorder 0, 0
  // Predicated region
  $region22: #{recurrent_transformer_rollout.1} parent=0 // pred_check
    %p29 = pneg %p28
  $region23: #{recurrent_transformer_rollout.1} parent=0 // pred_check_branch
    %31 = sbr.rel (%p29) target = $region25
  $region24: #{recurrent_transformer_rollout.1} parent=0 // pred_region
    %v32 = vld [vmem:[%s1] sm:$0x3]
    %vm33 = vcmask 254976
    %34 = vst.msk [vmem:[#allocation2] sm:$0x3] %vm33, %v32
  $region25: #{recurrent_transformer_rollout.1} parent=0 // pred_fallthru
    _
  %v35 = vld [vmem:[%s3] sm:$0xff]
  %v36 = vld [vmem:[%s3 + $0x8] sm:$0xff]
  %v37 = vld [vmem:[#allocation2] sm:$0x3]
  %s38 = smul.u32 0, 2
  %s39 = sld [smem:[#allocation4 + %s38]]
  %s40 = scalar_lea.vmem %s2, %s39
  %v41 = vld [vmem:[%s40] sm:$0x1]
  %s42 = sadd.s32 %s38, 1
  %s43 = sld [smem:[#allocation4 + %s42]]
  %s44 = scalar_lea.vmem %s2, %s43
  %v45 = vld [vmem:[%s44] sm:$0x1]
  %v47 = vrot.slane %v45, 7
  %vm49 = vcmask 1040384
  %v50 = vsel %vm49, %v41, %v47
  %vm51 = vcmask 254976
  %v52 = vsel %vm51, %v50, 0.0
  %53 = vadd.xlane.f32.xlu0 %v52
  %v54 = vpop.xlane.xlu0 %53
  %v55 = vrcp.pop 32.0
  %v56 = vmul.f32 %v54, %v55
  %v57 = vsub.f32 %v50, %v56
  %v58 = vmul.f32 %v57, %v57
  %v59 = vsel %vm51, %v58, 0.0
  %60 = vadd.xlane.f32.xlu0 %v59
  %v61 = vpop.xlane.xlu0 %60
  %v62 = vmul.f32 %v61, %v55
  %v63 = vadd.f32 %v62, 1e-05
  %v64 = vrsqrt.pop %v63
  %v65 = vmul.f32 %v57, %v64
  %v66 = vld [vmem:[%s5 + $0x20] sm:$0xf]
  %v67 = vld [vmem:[%s5 + $0x24] sm:$0xf]
  %v68 = vld [vmem:[%s5 + $0x28] sm:$0xf]
  %v69 = vld [vmem:[%s5 + $0x2c] sm:$0xf]
  %v70 = vpack.c.bf16 %v65, %v65
  %v71 = vlaneseq
  %v72 = vshrl.u32 %v71, 7
  %v73 = vsub.s32 6, %v72
  %v74 = vrot.slane %v35, %v73
  %v79 = vunpack.c.l.b16 %v66
  %v80 = vunpack.c.l.b16 %v67
  %v81 = vunpack.c.l.b16 %v68
  %v82 = vunpack.c.l.b16 %v69
  %v83 = vpack.c.b16 %v80, %v79
  %v84 = vpack.c.b16 %v82, %v81
  %vm87 = vcmask 261120
  %v89 = vsel %vm87, %v70, 0
  %91 = vmatprep.subr.bf16.mxu0 0
  %92 = vmatpush1.bf16.msra.mxu0 0
  %93 = vmatprep.subr.bf16.mxu0 0
  %94 = vmatpush1.bf16.msra.mxu0 0
  %95 = vmatprep.subr.bf16.mxu0 0
  %96 = vmatpush1.bf16.msra.mxu0 0
  %97 = vmatprep.subr.bf16.mxu0 0
  %98 = vmatpush1.bf16.msra.mxu0 0
  %99 = vmatprep.subr.bf16.mxu0 0
  %100 = vmatpush1.bf16.msra.mxu0 0
  %101 = vmatprep.subr.bf16.mxu0 0
  %102 = vmatpush1.bf16.msra.mxu0 0
  %103 = vmatprep.subr.bf16.mxu0 0
  %104 = vmatpush1.bf16.msra.mxu0 %v84
  %105 = vmatprep.subr.bf16.mxu0 0
  %106 = vmatpush1.bf16.msra.mxu0 %v83
  %107 = vmatprep.subr.bf16.mxu0 0
  %108 = vmatpush2.bf16.msra.mxu0 0
  %109 = vmatprep.subr.bf16.mxu0 0
  %110 = vmatpush2.bf16.msra.mxu0 0
  %111 = vmatprep.subr.bf16.mxu0 0
  %112 = vmatpush2.bf16.msra.mxu0 0
  %113 = vmatprep.subr.bf16.mxu0 0
  %114 = vmatpush2.bf16.msra.mxu0 0
  %115 = vmatprep.subr.bf16.mxu0 0
  %116 = vmatpush2.bf16.msra.mxu0 0
  %117 = vmatprep.subr.bf16.mxu0 0
  %118 = vmatpush2.bf16.msra.mxu0 0
  %119 = vmatprep.subr.bf16.mxu0 0
  %120 = vmatpush2.bf16.msra.mxu0 0
  %121 = vmatprep.subr.bf16.mxu0 0
  %122 = vmatpush2.bf16.msra.mxu0 0
  %123 = vmatprep.mubr.bf16.mxu0 0
  %124 = vmatmul.mubr.bf16.gmra.mxu0 %v89
  %v125 = vpop.f32.mrf.mxu0
  %v126 = vadd.f32 %v74, %v125
  %v127 = vpop.f32.mrf.mxu0
  %v128 = vpop.f32.mrf.mxu0
  %v129 = vpop.f32.mrf.mxu0
  %130 = vdwg.mxu0
  %v131 = vsel %vm51, %v37, 0.0
  %132 = vadd.xlane.f32.xlu0 %v131
  %v133 = vpop.xlane.xlu0 %132
  %v134 = vmul.f32 %v133, %v55
  %v135 = vsub.f32 %v37, %v134
  %v136 = vmul.f32 %v135, %v135
  %v137 = vsel %vm51, %v136, 0.0
  %138 = vadd.xlane.f32.xlu0 %v137
  %v139 = vpop.xlane.xlu0 %138
  %v140 = vmul.f32 %v139, %v55
  %v141 = vadd.f32 %v140, 1e-05
  %v142 = vrsqrt.pop %v141
  %v143 = vmul.f32 %v135, %v142
  %v144 = vlaneseq
  %v145 = vshrl.u32 %v144, 7
  %v146 = vsub.s32 0, %v145
  %v147 = vrot.slane %v35, %v146
  %v148 = vmul.f32 %v143, %v147
  %v149 = vlaneseq
  %v150 = vshrl.u32 %v149, 7
  %v151 = vsub.s32 2, %v150
  %v152 = vrot.slane %v35, %v151
  %v153 = vadd.f32 %v148, %v152
  %v156 = vunpack.c.l.s4 1966171168
  %v157 = vunpack.c.0.s8 %v156
  %v158 = vlaneseq
  %v159 = vshrl.u32 %v158, 7
  %v160 = vsub.s32 %v157, %v159
  %v161 = vrot.slane %v153, %v160
  %v162 = vcombine.high %v161, %v161
  %v164 = vunpack.c.l.s4 1966171168
  %v165 = vunpack.c.0.s8 %v164
  %v166 = vlaneseq
  %v167 = vshrl.u32 %v166, 7
  %v168 = vsub.s32 %v165, %v167
  %v169 = vrot.slane %v161, %v168
  %v171 = vunpack.c.l.s4 1966171168
  %v172 = vunpack.c.0.s8 %v171
  %v173 = vlaneseq
  %v174 = vshrl.u32 %v173, 7
  %v175 = vsub.s32 %v172, %v174
  %v176 = vrot.slane %v162, %v175
  %v177 = vlaneseq
  %v178 = vshrl.u32 %v177, 7
  %v179 = vsub.s32 0, %v178
  %v180 = vrot.slane %v169, %v179
  %v181 = vlaneseq
  %v182 = vshrl.u32 %v181, 7
  %v183 = vsub.s32 0, %v182
  %v184 = vrot.slane %v176, %v183
  %188 = vset.pattern.permute.xlu0 16
  %189 = vperm.xlu0 %188, %v126
  %v190 = vpop.permute.xlu0 %189
  %v192 = vmul.f32 %v180, %v190
  %v193 = vmul.f32 %v184, %v190
  %194 = vset.pattern.permute.xlu0 17
  %195 = vperm.xlu0 %194, %v126
  %v196 = vpop.permute.xlu0 %195
  %v198 = vmul.f32 %v180, %v196
  %v199 = vmul.f32 %v184, %v196
  %v202 = vrot.slane %v198, 6
  %v203 = vrot.slane %v199, 6
  %vm206 = vcmask 1041408
  %v207 = vsel %vm206, %v192, %v202
  %v208 = vsel %vm206, %v193, %v203
  %vm209 = vcmask 257024
  %v210 = vsel %vm209, %v207, -inf
  %211 = vmax.xlane.f32.xlu0 %v210
  %v212 = vpop.xlane.xlu0 %211
  %v213 = vsel %vm209, %v208, -inf
  %214 = vmax.xlane.f32.xlu0 %v213
  %v215 = vpop.xlane.xlu0 %214
  %v216 = vsub.f32 %v207, %v212
  %v217 = vsub.f32 %v208, %v215
  %v218 = vmul.f32 %v216, 1.442695
  %v219 = vpow.pop %v218
  %v220 = vmul.f32 %v217, 1.442695
  %v221 = vpow.pop %v220
  %v222 = vsel %vm209, %v219, 0.0
  %223 = vadd.xlane.f32.xlu0 %v222
  %v224 = vpop.xlane.xlu0 %223
  %v225 = vsel %vm209, %v221, 0.0
  %226 = vadd.xlane.f32.xlu0 %v225
  %v227 = vpop.xlane.xlu0 %226
  %v228 = vrcp.pop %v224
  %v229 = vrcp.pop %v227
  %v230 = vmul.f32 %v219, %v228
  %v231 = vmul.f32 %v221, %v229
  %v232 = vtanh.pop %v126
  %233 = vxpose.xlu0.b32.start [1/16] %v232, 128
  %234 = vxpose.xlu0.b32.cont [2/16] 0.0, 128
  %235 = vxpose.xlu0.b32.cont [3/16] 0.0, 128
  %236 = vxpose.xlu0.b32.cont [4/16] 0.0, 128
  %237 = vxpose.xlu0.b32.cont [5/16] 0.0, 128
  %238 = vxpose.xlu0.b32.cont [6/16] 0.0, 128
  %239 = vxpose.xlu0.b32.cont [7/16] 0.0, 128
  %240 = vxpose.xlu0.b32.cont [8/16] 0.0, 128
  %241 = vxpose.xlu0.b32.cont [9/16] 0.0, 128
  %242 = vxpose.xlu0.b32.cont [10/16] 0.0, 128
  %243 = vxpose.xlu0.b32.cont [11/16] 0.0, 128
  %244 = vxpose.xlu0.b32.cont [12/16] 0.0, 128
  %245 = vxpose.xlu0.b32.cont [13/16] 0.0, 128
  %246 = vxpose.xlu0.b32.cont [14/16] 0.0, 128
  %247 = vxpose.xlu0.b32.cont [15/16] 0.0, 128
  %248 = vxpose.xlu0.b32.end [16/16] 0.0, 128
  %v249 = vpop.trf.xlu0
  %v250 = vpop.trf.xlu0
  %v251 = vpop.trf.xlu0
  %v252 = vpop.trf.xlu0
  %v253 = vpop.trf.xlu0
  %v254 = vpop.trf.xlu0
  %v255 = vpop.trf.xlu0
  %v256 = vpop.trf.xlu0
  %v257 = vpop.trf.xlu0
  %v258 = vpop.trf.xlu0
  %v259 = vpop.trf.xlu0
  %v260 = vpop.trf.xlu0
  %v261 = vpop.trf.xlu0
  %v262 = vpop.trf.xlu0
  %v263 = vpop.trf.xlu0
  %v264 = vpop.trf.xlu0
  %v265 = vlaneseq
  %v266 = vshrl.u32 %v265, 7
  %v267 = vsub.s32 0, %v266
  %v268 = vrot.slane %v230, %v267
  %v269 = vlaneseq
  %v270 = vshrl.u32 %v269, 7
  %v271 = vsub.s32 0, %v270
  %v272 = vrot.slane %v231, %v271
  %274 = vset.pattern.permute.xlu0 0
  %275 = vperm.xlu0 %274, %v249
  %v276 = vpop.permute.xlu0 %275
  %v278 = vmul.f32 %v268, %v276
  %v279 = vmul.f32 %v272, %v276
  %v280 = vlaneseq
  %v281 = vshrl.u32 %v280, 7
  %v282 = vsub.s32 1, %v281
  %v283 = vrot.slane %v230, %v282
  %v284 = vlaneseq
  %v285 = vshrl.u32 %v284, 7
  %v286 = vsub.s32 1, %v285
  %v287 = vrot.slane %v231, %v286
  %288 = vset.pattern.permute.xlu0 1
  %289 = vperm.xlu0 %288, %v249
  %v290 = vpop.permute.xlu0 %289
  %v292 = vmul.f32 %v283, %v290
  %v293 = vmul.f32 %v287, %v290
  %v294 = vadd.f32 %v278, %v292
  %v295 = vadd.f32 %v279, %v293
  %v296 = vlaneseq
  %v297 = vshrl.u32 %v296, 7
  %v298 = vsub.s32 2, %v297
  %v299 = vrot.slane %v230, %v298
  %v300 = vlaneseq
  %v301 = vshrl.u32 %v300, 7
  %v302 = vsub.s32 2, %v301
  %v303 = vrot.slane %v231, %v302
  %305 = vset.pattern.permute.xlu0 0
  %306 = vperm.xlu0 %305, %v250
  %v307 = vpop.permute.xlu0 %306
  %v309 = vmul.f32 %v299, %v307
  %v310 = vmul.f32 %v303, %v307
  %v311 = vlaneseq
  %v312 = vshrl.u32 %v311, 7
  %v313 = vsub.s32 3, %v312
  %v314 = vrot.slane %v230, %v313
  %v315 = vlaneseq
  %v316 = vshrl.u32 %v315, 7
  %v317 = vsub.s32 3, %v316
  %v318 = vrot.slane %v231, %v317
  %319 = vset.pattern.permute.xlu0 1
  %320 = vperm.xlu0 %319, %v250
  %v321 = vpop.permute.xlu0 %320
  %v323 = vmul.f32 %v314, %v321
  %v324 = vmul.f32 %v318, %v321
  %v325 = vadd.f32 %v309, %v323
  %v326 = vadd.f32 %v310, %v324
  %v327 = vtanh.pop %v294
  %v328 = vtanh.pop %v325
  %v329 = vtanh.pop %v295
  %v330 = vtanh.pop %v326
  %v331 = vcombine.high %v327, 0.0
  %v333 = vunpack.c.l.s4 1983009808
  %v334 = vunpack.c.0.s8 %v333
  %v335 = vlaneseq
  %v336 = vshrl.u32 %v335, 7
  %v337 = vsub.s32 %v334, %v336
  %v338 = vrot.slane %v327, %v337
  %v340 = vunpack.c.l.s4 1983009808
  %v341 = vunpack.c.0.s8 %v340
  %v342 = vlaneseq
  %v343 = vshrl.u32 %v342, 7
  %v344 = vsub.s32 %v341, %v343
  %v345 = vrot.slane %v331, %v344
  %v346 = vcombine.high %v329, 0.0
  %v348 = vunpack.c.l.s4 1983009808
  %v349 = vunpack.c.0.s8 %v348
  %v350 = vlaneseq
  %v351 = vshrl.u32 %v350, 7
  %v352 = vsub.s32 %v349, %v351
  %v353 = vrot.slane %v329, %v352
  %v355 = vunpack.c.l.s4 1983009808
  %v356 = vunpack.c.0.s8 %v355
  %v357 = vlaneseq
  %v358 = vshrl.u32 %v357, 7
  %v359 = vsub.s32 %v356, %v358
  %v360 = vrot.slane %v346, %v359
  %v361 = vcombine.low %v338, %v353
  %v362 = vcombine.high %v338, %v353
  %v364 = vunpack.c.l.s4 1934713408
  %v365 = vunpack.c.0.s8 %v364
  %v366 = vlaneseq
  %v367 = vshrl.u32 %v366, 7
  %v368 = vsub.s32 %v365, %v367
  %v369 = vrot.slane %v361, %v368
  %v371 = vunpack.c.l.s4 1934713408
  %v372 = vunpack.c.0.s8 %v371
  %v373 = vlaneseq
  %v374 = vshrl.u32 %v373, 7
  %v375 = vsub.s32 %v372, %v374
  %v376 = vrot.slane %v362, %v375
  %v377 = vcombine.low %v345, %v360
  %v378 = vcombine.high %v345, %v360
  %v380 = vunpack.c.l.s4 1934713408
  %v381 = vunpack.c.0.s8 %v380
  %v382 = vlaneseq
  %v383 = vshrl.u32 %v382, 7
  %v384 = vsub.s32 %v381, %v383
  %v385 = vrot.slane %v377, %v384
  %v387 = vunpack.c.l.s4 1934713408
  %v388 = vunpack.c.0.s8 %v387
  %v389 = vlaneseq
  %v390 = vshrl.u32 %v389, 7
  %v391 = vsub.s32 %v388, %v390
  %v392 = vrot.slane %v378, %v391
  %v393 = vcombine.high %v369, 0.0
  %v394 = vcombine.high %v376, 0.0
  %v395 = vcombine.high %v385, 0.0
  %v396 = vcombine.high %v392, 0.0
  %v397 = vcombine.high %v328, 0.0
  %v399 = vunpack.c.l.s4 1983009808
  %v400 = vunpack.c.0.s8 %v399
  %v401 = vlaneseq
  %v402 = vshrl.u32 %v401, 7
  %v403 = vsub.s32 %v400, %v402
  %v404 = vrot.slane %v328, %v403
  %v406 = vunpack.c.l.s4 1983009808
  %v407 = vunpack.c.0.s8 %v406
  %v408 = vlaneseq
  %v409 = vshrl.u32 %v408, 7
  %v410 = vsub.s32 %v407, %v409
  %v411 = vrot.slane %v397, %v410
  %v412 = vcombine.high %v330, 0.0
  %v414 = vunpack.c.l.s4 1983009808
  %v415 = vunpack.c.0.s8 %v414
  %v416 = vlaneseq
  %v417 = vshrl.u32 %v416, 7
  %v418 = vsub.s32 %v415, %v417
  %v419 = vrot.slane %v330, %v418
  %v421 = vunpack.c.l.s4 1983009808
  %v422 = vunpack.c.0.s8 %v421
  %v423 = vlaneseq
  %v424 = vshrl.u32 %v423, 7
  %v425 = vsub.s32 %v422, %v424
  %v426 = vrot.slane %v412, %v425
  %v427 = vcombine.low %v404, %v419
  %v428 = vcombine.high %v404, %v419
  %v430 = vunpack.c.l.s4 1934713408
  %v431 = vunpack.c.0.s8 %v430
  %v432 = vlaneseq
  %v433 = vshrl.u32 %v432, 7
  %v434 = vsub.s32 %v431, %v433
  %v435 = vrot.slane %v427, %v434
  %v437 = vunpack.c.l.s4 1934713408
  %v438 = vunpack.c.0.s8 %v437
  %v439 = vlaneseq
  %v440 = vshrl.u32 %v439, 7
  %v441 = vsub.s32 %v438, %v440
  %v442 = vrot.slane %v428, %v441
  %v443 = vcombine.low %v411, %v426
  %v444 = vcombine.high %v411, %v426
  %v446 = vunpack.c.l.s4 1934713408
  %v447 = vunpack.c.0.s8 %v446
  %v448 = vlaneseq
  %v449 = vshrl.u32 %v448, 7
  %v450 = vsub.s32 %v447, %v449
  %v451 = vrot.slane %v443, %v450
  %v453 = vunpack.c.l.s4 1934713408
  %v454 = vunpack.c.0.s8 %v453
  %v455 = vlaneseq
  %v456 = vshrl.u32 %v455, 7
  %v457 = vsub.s32 %v454, %v456
  %v458 = vrot.slane %v444, %v457
  %v459 = vcombine.high %v435, 0.0
  %v460 = vcombine.high %v442, 0.0
  %v461 = vcombine.high %v451, 0.0
  %v462 = vcombine.high %v458, 0.0
  %464 = vrot.lane.b32.xlu0 %v393, 32
  %v465 = vpop.permute.xlu0 %464
  %468 = vrot.lane.b32.xlu0 %v376, 64
  %v469 = vpop.permute.xlu0 %468
  %472 = vrot.lane.b32.xlu0 %v394, 96
  %v473 = vpop.permute.xlu0 %472
  %476 = vrot.lane.b32.xlu0 %v395, 32
  %v477 = vpop.permute.xlu0 %476
  %480 = vrot.lane.b32.xlu0 %v392, 64
  %v481 = vpop.permute.xlu0 %480
  %484 = vrot.lane.b32.xlu0 %v396, 96
  %v485 = vpop.permute.xlu0 %484
  %488 = vrot.lane.b32.xlu0 %v459, 32
  %v489 = vpop.permute.xlu0 %488
  %492 = vrot.lane.b32.xlu0 %v442, 64
  %v493 = vpop.permute.xlu0 %492
  %496 = vrot.lane.b32.xlu0 %v460, 96
  %v497 = vpop.permute.xlu0 %496
  %500 = vrot.lane.b32.xlu0 %v461, 32
  %v501 = vpop.permute.xlu0 %500
  %504 = vrot.lane.b32.xlu0 %v458, 64
  %v505 = vpop.permute.xlu0 %504
  %508 = vrot.lane.b32.xlu0 %v462, 96
  %v509 = vpop.permute.xlu0 %508
  %v511 = vsel %vm87, %v369, %v465
  %vm512 = vcmask 523264
  %v513 = vsel %vm512, %v511, %v469
  %vm514 = vcmask 785408
  %v515 = vsel %vm514, %v513, %v473
  %v516 = vsel %vm87, %v385, %v477
  %v517 = vsel %vm512, %v516, %v481
  %v518 = vsel %vm514, %v517, %v485
  %v519 = vsel %vm87, %v435, %v489
  %v520 = vsel %vm512, %v519, %v493
  %v521 = vsel %vm514, %v520, %v497
  %v522 = vsel %vm87, %v451, %v501
  %v523 = vsel %vm512, %v522, %v505
  %v524 = vsel %vm514, %v523, %v509
  %v525 = vld [vmem:[%s4] sm:$0xf]
  %v526 = vld [vmem:[%s4 + $0x4] sm:$0xf]
  %v527 = vld [vmem:[%s4 + $0x8] sm:$0xf]
  %v528 = vld [vmem:[%s4 + $0xc] sm:$0xf]
  %v529 = vld [vmem:[%s4 + $0x10] sm:$0xf]
  %v530 = vld [vmem:[%s4 + $0x14] sm:$0xf]
  %v531 = vld [vmem:[%s4 + $0x18] sm:$0xf]
  %v532 = vld [vmem:[%s4 + $0x1c] sm:$0xf]
  %v533 = vld [vmem:[%s4 + $0x20] sm:$0xf]
  %v534 = vld [vmem:[%s4 + $0x24] sm:$0xf]
  %v535 = vld [vmem:[%s4 + $0x28] sm:$0xf]
  %v536 = vld [vmem:[%s4 + $0x2c] sm:$0xf]
  %v537 = vld [vmem:[%s4 + $0x30] sm:$0xf]
  %v538 = vld [vmem:[%s4 + $0x34] sm:$0xf]
  %v539 = vld [vmem:[%s4 + $0x38] sm:$0xf]
  %v540 = vld [vmem:[%s4 + $0x3c] sm:$0xf]
  %v541 = vld [vmem:[%s4 + $0x40] sm:$0xf]
  %v542 = vld [vmem:[%s4 + $0x44] sm:$0xf]
  %v543 = vld [vmem:[%s4 + $0x48] sm:$0xf]
  %v544 = vld [vmem:[%s4 + $0x4c] sm:$0xf]
  %v545 = vld [vmem:[%s4 + $0x50] sm:$0xf]
  %v546 = vld [vmem:[%s4 + $0x54] sm:$0xf]
  %v547 = vld [vmem:[%s4 + $0x58] sm:$0xf]
  %v548 = vld [vmem:[%s4 + $0x5c] sm:$0xf]
  %v549 = vld [vmem:[%s4 + $0x60] sm:$0xf]
  %v550 = vld [vmem:[%s4 + $0x64] sm:$0xf]
  %v551 = vld [vmem:[%s4 + $0x68] sm:$0xf]
  %v552 = vld [vmem:[%s4 + $0x6c] sm:$0xf]
  %v553 = vld [vmem:[%s4 + $0x70] sm:$0xf]
  %v554 = vld [vmem:[%s4 + $0x74] sm:$0xf]
  %v555 = vld [vmem:[%s4 + $0x78] sm:$0xf]
  %v556 = vld [vmem:[%s4 + $0x7c] sm:$0xf]
  %v557 = vld [vmem:[%s4 + $0x80] sm:$0xf]
  %v558 = vld [vmem:[%s4 + $0x84] sm:$0xf]
  %v559 = vld [vmem:[%s4 + $0x88] sm:$0xf]
  %v560 = vld [vmem:[%s4 + $0x8c] sm:$0xf]
  %v561 = vld [vmem:[%s4 + $0x90] sm:$0xf]
  %v562 = vld [vmem:[%s4 + $0x94] sm:$0xf]
  %v563 = vld [vmem:[%s4 + $0x98] sm:$0xf]
  %v564 = vld [vmem:[%s4 + $0x9c] sm:$0xf]
  %v565 = vld [vmem:[%s4 + $0xa0] sm:$0xf]
  %v566 = vld [vmem:[%s4 + $0xa4] sm:$0xf]
  %v567 = vld [vmem:[%s4 + $0xa8] sm:$0xf]
  %v568 = vld [vmem:[%s4 + $0xac] sm:$0xf]
  %v569 = vld [vmem:[%s4 + $0xb0] sm:$0xf]
  %v570 = vld [vmem:[%s4 + $0xb4] sm:$0xf]
  %v571 = vld [vmem:[%s4 + $0xb8] sm:$0xf]
  %v572 = vld [vmem:[%s4 + $0xbc] sm:$0xf]
  %v573 = vld [vmem:[%s4 + $0xc0] sm:$0xf]
  %v574 = vld [vmem:[%s4 + $0xc4] sm:$0xf]
  %v575 = vld [vmem:[%s4 + $0xc8] sm:$0xf]
  %v576 = vld [vmem:[%s4 + $0xcc] sm:$0xf]
  %v577 = vld [vmem:[%s4 + $0xd0] sm:$0xf]
  %v578 = vld [vmem:[%s4 + $0xd4] sm:$0xf]
  %v579 = vld [vmem:[%s4 + $0xd8] sm:$0xf]
  %v580 = vld [vmem:[%s4 + $0xdc] sm:$0xf]
  %v581 = vld [vmem:[%s4 + $0xe0] sm:$0xf]
  %v582 = vld [vmem:[%s4 + $0xe4] sm:$0xf]
  %v583 = vld [vmem:[%s4 + $0xe8] sm:$0xf]
  %v584 = vld [vmem:[%s4 + $0xec] sm:$0xf]
  %v585 = vld [vmem:[%s4 + $0xf0] sm:$0xf]
  %v586 = vld [vmem:[%s4 + $0xf4] sm:$0xf]
  %v587 = vld [vmem:[%s4 + $0xf8] sm:$0xf]
  %v588 = vld [vmem:[%s4 + $0xfc] sm:$0xf]
  %v589 = vpack.c.bf16 %v515, %v515
  %v590 = vpack.c.bf16 %v518, %v518
  %v591 = vpack.c.bf16 %v521, %v521
  %v592 = vpack.c.bf16 %v524, %v524
  %v593 = vlaneseq
  %v594 = vshrl.u32 %v593, 7
  %v595 = vsub.s32 7, %v594
  %v596 = vrot.slane %v35, %v595
  %v661 = vunpack.c.l.b16 %v525
  %v662 = vunpack.c.l.b16 %v526
  %v663 = vunpack.c.l.b16 %v527
  %v664 = vunpack.c.l.b16 %v528
  %v665 = vunpack.c.l.b16 %v529
  %v666 = vunpack.c.l.b16 %v530
  %v667 = vunpack.c.l.b16 %v531
  %v668 = vunpack.c.l.b16 %v532
  %v669 = vunpack.c.l.b16 %v533
  %v670 = vunpack.c.l.b16 %v534
  %v671 = vunpack.c.l.b16 %v535
  %v672 = vunpack.c.l.b16 %v536
  %v673 = vunpack.c.l.b16 %v537
  %v674 = vunpack.c.l.b16 %v538
  %v675 = vunpack.c.l.b16 %v539
  %v676 = vunpack.c.l.b16 %v540
  %v677 = vunpack.c.l.b16 %v541
  %v678 = vunpack.c.l.b16 %v542
  %v679 = vunpack.c.l.b16 %v543
  %v680 = vunpack.c.l.b16 %v544
  %v681 = vunpack.c.l.b16 %v545
  %v682 = vunpack.c.l.b16 %v546
  %v683 = vunpack.c.l.b16 %v547
  %v684 = vunpack.c.l.b16 %v548
  %v685 = vunpack.c.l.b16 %v549
  %v686 = vunpack.c.l.b16 %v550
  %v687 = vunpack.c.l.b16 %v551
  %v688 = vunpack.c.l.b16 %v552
  %v689 = vunpack.c.l.b16 %v553
  %v690 = vunpack.c.l.b16 %v554
  %v691 = vunpack.c.l.b16 %v555
  %v692 = vunpack.c.l.b16 %v556
  %v693 = vunpack.c.l.b16 %v557
  %v694 = vunpack.c.l.b16 %v558
  %v695 = vunpack.c.l.b16 %v559
  %v696 = vunpack.c.l.b16 %v560
  %v697 = vunpack.c.l.b16 %v561
  %v698 = vunpack.c.l.b16 %v562
  %v699 = vunpack.c.l.b16 %v563
  %v700 = vunpack.c.l.b16 %v564
  %v701 = vunpack.c.l.b16 %v565
  %v702 = vunpack.c.l.b16 %v566
  %v703 = vunpack.c.l.b16 %v567
  %v704 = vunpack.c.l.b16 %v568
  %v705 = vunpack.c.l.b16 %v569
  %v706 = vunpack.c.l.b16 %v570
  %v707 = vunpack.c.l.b16 %v571
  %v708 = vunpack.c.l.b16 %v572
  %v709 = vunpack.c.l.b16 %v573
  %v710 = vunpack.c.l.b16 %v574
  %v711 = vunpack.c.l.b16 %v575
  %v712 = vunpack.c.l.b16 %v576
  %v713 = vunpack.c.l.b16 %v577
  %v714 = vunpack.c.l.b16 %v578
  %v715 = vunpack.c.l.b16 %v579
  %v716 = vunpack.c.l.b16 %v580
  %v717 = vunpack.c.l.b16 %v581
  %v718 = vunpack.c.l.b16 %v582
  %v719 = vunpack.c.l.b16 %v583
  %v720 = vunpack.c.l.b16 %v584
  %v721 = vunpack.c.l.b16 %v585
  %v722 = vunpack.c.l.b16 %v586
  %v723 = vunpack.c.l.b16 %v587
  %v724 = vunpack.c.l.b16 %v588
  %v725 = vpack.c.b16 %v662, %v661
  %v726 = vpack.c.b16 %v664, %v663
  %v727 = vpack.c.b16 %v666, %v665
  %v728 = vpack.c.b16 %v668, %v667
  %v729 = vpack.c.b16 %v670, %v669
  %v730 = vpack.c.b16 %v672, %v671
  %v731 = vpack.c.b16 %v674, %v673
  %v732 = vpack.c.b16 %v676, %v675
  %v733 = vpack.c.b16 %v678, %v677
  %v734 = vpack.c.b16 %v680, %v679
  %v735 = vpack.c.b16 %v682, %v681
  %v736 = vpack.c.b16 %v684, %v683
  %v737 = vpack.c.b16 %v686, %v685
  %v738 = vpack.c.b16 %v688, %v687
  %v739 = vpack.c.b16 %v690, %v689
  %v740 = vpack.c.b16 %v692, %v691
  %v741 = vpack.c.b16 %v694, %v693
  %v742 = vpack.c.b16 %v696, %v695
  %v743 = vpack.c.b16 %v698, %v697
  %v744 = vpack.c.b16 %v700, %v699
  %v745 = vpack.c.b16 %v702, %v701
  %v746 = vpack.c.b16 %v704, %v703
  %v747 = vpack.c.b16 %v706, %v705
  %v748 = vpack.c.b16 %v708, %v707
  %v749 = vpack.c.b16 %v710, %v709
  %v750 = vpack.c.b16 %v712, %v711
  %v751 = vpack.c.b16 %v714, %v713
  %v752 = vpack.c.b16 %v716, %v715
  %v753 = vpack.c.b16 %v718, %v717
  %v754 = vpack.c.b16 %v720, %v719
  %v755 = vpack.c.b16 %v722, %v721
  %v756 = vpack.c.b16 %v724, %v723
  %789 = vmatprep.subr.bf16.mxu0 0
  %790 = vmatpush1.bf16.msra.mxu0 %v732
  %791 = vmatprep.subr.bf16.mxu0 0
  %792 = vmatpush1.bf16.msra.mxu0 %v731
  %793 = vmatprep.subr.bf16.mxu0 0
  %794 = vmatpush1.bf16.msra.mxu0 %v730
  %795 = vmatprep.subr.bf16.mxu0 0
  %796 = vmatpush1.bf16.msra.mxu0 %v729
  %797 = vmatprep.subr.bf16.mxu0 0
  %798 = vmatpush1.bf16.msra.mxu0 %v728
  %799 = vmatprep.subr.bf16.mxu0 0
  %800 = vmatpush1.bf16.msra.mxu0 %v727
  %801 = vmatprep.subr.bf16.mxu0 0
  %802 = vmatpush1.bf16.msra.mxu0 %v726
  %803 = vmatprep.subr.bf16.mxu0 0
  %804 = vmatpush1.bf16.msra.mxu0 %v725
  %805 = vmatprep.subr.bf16.mxu0 0
  %806 = vmatpush2.bf16.msra.mxu0 %v740
  %807 = vmatprep.subr.bf16.mxu0 0
  %808 = vmatpush2.bf16.msra.mxu0 %v739
  %809 = vmatprep.subr.bf16.mxu0 0
  %810 = vmatpush2.bf16.msra.mxu0 %v738
  %811 = vmatprep.subr.bf16.mxu0 0
  %812 = vmatpush2.bf16.msra.mxu0 %v737
  %813 = vmatprep.subr.bf16.mxu0 0
  %814 = vmatpush2.bf16.msra.mxu0 %v736
  %815 = vmatprep.subr.bf16.mxu0 0
  %816 = vmatpush2.bf16.msra.mxu0 %v735
  %817 = vmatprep.subr.bf16.mxu0 0
  %818 = vmatpush2.bf16.msra.mxu0 %v734
  %819 = vmatprep.subr.bf16.mxu0 0
  %820 = vmatpush2.bf16.msra.mxu0 %v733
  %821 = vmatprep.mubr.bf16.mxu0 %v590
  %822 = vmatmul.mubr.bf16.gmra.mxu0 %v589
  %v823 = vpop.f32.mrf.mxu0
  %v824 = vadd.f32 %v596, %v823
  %v825 = vpop.f32.mrf.mxu0
  %v826 = vpop.f32.mrf.mxu0
  %v827 = vpop.f32.mrf.mxu0
  %828 = vdwg.mxu0
  %829 = vmatprep.subr.bf16.mxu0 0
  %830 = vmatpush1.bf16.msra.mxu0 %v748
  %831 = vmatprep.subr.bf16.mxu0 0
  %832 = vmatpush1.bf16.msra.mxu0 %v747
  %833 = vmatprep.subr.bf16.mxu0 0
  %834 = vmatpush1.bf16.msra.mxu0 %v746
  %835 = vmatprep.subr.bf16.mxu0 0
  %836 = vmatpush1.bf16.msra.mxu0 %v745
  %837 = vmatprep.subr.bf16.mxu0 0
  %838 = vmatpush1.bf16.msra.mxu0 %v744
  %839 = vmatprep.subr.bf16.mxu0 0
  %840 = vmatpush1.bf16.msra.mxu0 %v743
  %841 = vmatprep.subr.bf16.mxu0 0
  %842 = vmatpush1.bf16.msra.mxu0 %v742
  %843 = vmatprep.subr.bf16.mxu0 0
  %844 = vmatpush1.bf16.msra.mxu0 %v741
  %845 = vmatprep.subr.bf16.mxu0 0
  %846 = vmatpush2.bf16.msra.mxu0 %v756
  %847 = vmatprep.subr.bf16.mxu0 0
  %848 = vmatpush2.bf16.msra.mxu0 %v755
  %849 = vmatprep.subr.bf16.mxu0 0
  %850 = vmatpush2.bf16.msra.mxu0 %v754
  %851 = vmatprep.subr.bf16.mxu0 0
  %852 = vmatpush2.bf16.msra.mxu0 %v753
  %853 = vmatprep.subr.bf16.mxu0 0
  %854 = vmatpush2.bf16.msra.mxu0 %v752
  %855 = vmatprep.subr.bf16.mxu0 0
  %856 = vmatpush2.bf16.msra.mxu0 %v751
  %857 = vmatprep.subr.bf16.mxu0 0
  %858 = vmatpush2.bf16.msra.mxu0 %v750
  %859 = vmatprep.subr.bf16.mxu0 0
  %860 = vmatpush2.bf16.msra.mxu0 %v749
  %861 = vmatprep.mubr.bf16.mxu0 %v592
  %862 = vmatmul.mubr.bf16.gmra.mxu0 %v591
  %v863 = vpop.f32.mrf.mxu0
  %v864 = vadd.f32 %v824, %v863
  %v865 = vpop.f32.mrf.mxu0
  %v866 = vpop.f32.mrf.mxu0
  %v867 = vpop.f32.mrf.mxu0
  %868 = vdwg.mxu0
  %v869 = vadd.f32 %v37, %v864
  %v870 = vsel %vm51, %v869, 0.0
  %871 = vadd.xlane.f32.xlu0 %v870
  %v872 = vpop.xlane.xlu0 %871
  %v873 = vmul.f32 %v872, %v55
  %v874 = vsub.f32 %v869, %v873
  %v875 = vmul.f32 %v874, %v874
  %v876 = vsel %vm51, %v875, 0.0
  %877 = vadd.xlane.f32.xlu0 %v876
  %v878 = vpop.xlane.xlu0 %877
  %v879 = vmul.f32 %v878, %v55
  %v880 = vadd.f32 %v879, 1e-05
  %v881 = vrsqrt.pop %v880
  %v882 = vmul.f32 %v874, %v881
  %v883 = vld [vmem:[%s5] sm:$0xf]
  %v884 = vld [vmem:[%s5 + $0x4] sm:$0xf]
  %v885 = vld [vmem:[%s5 + $0x8] sm:$0xf]
  %v886 = vld [vmem:[%s5 + $0xc] sm:$0xf]
  %v887 = vpack.c.bf16 %v882, %v882
  %v888 = vlaneseq
  %v889 = vshrl.u32 %v888, 7
  %v890 = vsub.s32 1, %v889
  %v891 = vrot.slane %v36, %v890
  %v896 = vunpack.c.l.b16 %v883
  %v897 = vunpack.c.l.b16 %v884
  %v898 = vunpack.c.l.b16 %v885
  %v899 = vunpack.c.l.b16 %v886
  %v900 = vpack.c.b16 %v897, %v896
  %v901 = vpack.c.b16 %v899, %v898
  %v905 = vsel %vm87, %v887, 0
  %907 = vmatprep.subr.bf16.mxu0 0
  %908 = vmatpush1.bf16.msra.mxu0 0
  %909 = vmatprep.subr.bf16.mxu0 0
  %910 = vmatpush1.bf16.msra.mxu0 0
  %911 = vmatprep.subr.bf16.mxu0 0
  %912 = vmatpush1.bf16.msra.mxu0 0
  %913 = vmatprep.subr.bf16.mxu0 0
  %914 = vmatpush1.bf16.msra.mxu0 0
  %915 = vmatprep.subr.bf16.mxu0 0
  %916 = vmatpush1.bf16.msra.mxu0 0
  %917 = vmatprep.subr.bf16.mxu0 0
  %918 = vmatpush1.bf16.msra.mxu0 0
  %919 = vmatprep.subr.bf16.mxu0 0
  %920 = vmatpush1.bf16.msra.mxu0 %v901
  %921 = vmatprep.subr.bf16.mxu0 0
  %922 = vmatpush1.bf16.msra.mxu0 %v900
  %923 = vmatprep.subr.bf16.mxu0 0
  %924 = vmatpush2.bf16.msra.mxu0 0
  %925 = vmatprep.subr.bf16.mxu0 0
  %926 = vmatpush2.bf16.msra.mxu0 0
  %927 = vmatprep.subr.bf16.mxu0 0
  %928 = vmatpush2.bf16.msra.mxu0 0
  %929 = vmatprep.subr.bf16.mxu0 0
  %930 = vmatpush2.bf16.msra.mxu0 0
  %931 = vmatprep.subr.bf16.mxu0 0
  %932 = vmatpush2.bf16.msra.mxu0 0
  %933 = vmatprep.subr.bf16.mxu0 0
  %934 = vmatpush2.bf16.msra.mxu0 0
  %935 = vmatprep.subr.bf16.mxu0 0
  %936 = vmatpush2.bf16.msra.mxu0 0
  %937 = vmatprep.subr.bf16.mxu0 0
  %938 = vmatpush2.bf16.msra.mxu0 0
  %939 = vmatprep.mubr.bf16.mxu0 0
  %940 = vmatmul.mubr.bf16.gmra.mxu0 %v905
  %v941 = vpop.f32.mrf.mxu0
  %v942 = vadd.f32 %v891, %v941
  %v943 = vpop.f32.mrf.mxu0
  %v944 = vpop.f32.mrf.mxu0
  %v945 = vpop.f32.mrf.mxu0
  %946 = vdwg.mxu0
  %v947 = vtanh.pop %v942
  %v948 = vld [vmem:[%s4 + $0x200] sm:$0xf]
  %v949 = vld [vmem:[%s4 + $0x204] sm:$0xf]
  %v950 = vld [vmem:[%s4 + $0x208] sm:$0xf]
  %v951 = vld [vmem:[%s4 + $0x20c] sm:$0xf]
  %v952 = vld [vmem:[%s4 + $0x210] sm:$0xf]
  %v953 = vld [vmem:[%s4 + $0x214] sm:$0xf]
  %v954 = vld [vmem:[%s4 + $0x218] sm:$0xf]
  %v955 = vld [vmem:[%s4 + $0x21c] sm:$0xf]
  %v956 = vld [vmem:[%s4 + $0x220] sm:$0xf]
  %v957 = vld [vmem:[%s4 + $0x224] sm:$0xf]
  %v958 = vld [vmem:[%s4 + $0x228] sm:$0xf]
  %v959 = vld [vmem:[%s4 + $0x22c] sm:$0xf]
  %v960 = vld [vmem:[%s4 + $0x230] sm:$0xf]
  %v961 = vld [vmem:[%s4 + $0x234] sm:$0xf]
  %v962 = vld [vmem:[%s4 + $0x238] sm:$0xf]
  %v963 = vld [vmem:[%s4 + $0x23c] sm:$0xf]
  %v964 = vpack.c.bf16 %v947, %v947
  %v981 = vunpack.c.l.b16 %v948
  %v982 = vunpack.c.l.b16 %v949
  %v983 = vunpack.c.l.b16 %v950
  %v984 = vunpack.c.l.b16 %v951
  %v985 = vunpack.c.l.b16 %v952
  %v986 = vunpack.c.l.b16 %v953
  %v987 = vunpack.c.l.b16 %v954
  %v988 = vunpack.c.l.b16 %v955
  %v989 = vunpack.c.l.b16 %v956
  %v990 = vunpack.c.l.b16 %v957
  %v991 = vunpack.c.l.b16 %v958
  %v992 = vunpack.c.l.b16 %v959
  %v993 = vunpack.c.l.b16 %v960
  %v994 = vunpack.c.l.b16 %v961
  %v995 = vunpack.c.l.b16 %v962
  %v996 = vunpack.c.l.b16 %v963
  %v997 = vpack.c.b16 %v982, %v981
  %v998 = vpack.c.b16 %v984, %v983
  %v999 = vpack.c.b16 %v986, %v985
  %v1000 = vpack.c.b16 %v988, %v987
  %v1001 = vpack.c.b16 %v990, %v989
  %v1002 = vpack.c.b16 %v992, %v991
  %v1003 = vpack.c.b16 %v994, %v993
  %v1004 = vpack.c.b16 %v996, %v995
  %1013 = vmatprep.subr.bf16.mxu0 0
  %1014 = vmatpush1.bf16.msra.mxu0 %v1004
  %1015 = vmatprep.subr.bf16.mxu0 0
  %1016 = vmatpush1.bf16.msra.mxu0 %v1003
  %1017 = vmatprep.subr.bf16.mxu0 0
  %1018 = vmatpush1.bf16.msra.mxu0 %v1002
  %1019 = vmatprep.subr.bf16.mxu0 0
  %1020 = vmatpush1.bf16.msra.mxu0 %v1001
  %1021 = vmatprep.subr.bf16.mxu0 0
  %1022 = vmatpush1.bf16.msra.mxu0 %v1000
  %1023 = vmatprep.subr.bf16.mxu0 0
  %1024 = vmatpush1.bf16.msra.mxu0 %v999
  %1025 = vmatprep.subr.bf16.mxu0 0
  %1026 = vmatpush1.bf16.msra.mxu0 %v998
  %1027 = vmatprep.subr.bf16.mxu0 0
  %1028 = vmatpush1.bf16.msra.mxu0 %v997
  %1029 = vmatprep.subr.bf16.mxu0 0
  %1030 = vmatpush2.bf16.msra.mxu0 0
  %1031 = vmatprep.subr.bf16.mxu0 0
  %1032 = vmatpush2.bf16.msra.mxu0 0
  %1033 = vmatprep.subr.bf16.mxu0 0
  %1034 = vmatpush2.bf16.msra.mxu0 0
  %1035 = vmatprep.subr.bf16.mxu0 0
  %1036 = vmatpush2.bf16.msra.mxu0 0
  %1037 = vmatprep.subr.bf16.mxu0 0
  %1038 = vmatpush2.bf16.msra.mxu0 0
  %1039 = vmatprep.subr.bf16.mxu0 0
  %1040 = vmatpush2.bf16.msra.mxu0 0
  %1041 = vmatprep.subr.bf16.mxu0 0
  %1042 = vmatpush2.bf16.msra.mxu0 0
  %1043 = vmatprep.subr.bf16.mxu0 0
  %1044 = vmatpush2.bf16.msra.mxu0 0
  %1045 = vmatprep.mubr.bf16.mxu0 0
  %1046 = vmatmul.mubr.bf16.gmra.mxu0 %v964
  %v1047 = vpop.f32.mrf.mxu0
  %v1048 = vadd.f32 0.0, %v1047
  %v1049 = vpop.f32.mrf.mxu0
  %v1050 = vpop.f32.mrf.mxu0
  %v1051 = vpop.f32.mrf.mxu0
  %1052 = vdwg.mxu0
  %v1053 = vadd.f32 %v869, %v1048
  %v1054 = vlaneseq
  %v1055 = vshrl.u32 %v1054, 7
  %v1056 = vsub.s32 3, %v1055
  %v1057 = vrot.slane %v36, %v1056
  %v1058 = vadd.f32 %v1053, %v1057
  %v1059 = vsel %vm51, %v1058, 0.0
  %1060 = vadd.xlane.f32.xlu0 %v1059
  %v1061 = vpop.xlane.xlu0 %1060
  %v1062 = vmul.f32 %v1061, %v55
  %v1063 = vsub.f32 %v1058, %v1062
  %v1064 = vmul.f32 %v1063, %v1063
  %v1065 = vsel %vm51, %v1064, 0.0
  %1066 = vadd.xlane.f32.xlu0 %v1065
  %v1067 = vpop.xlane.xlu0 %1066
  %v1068 = vmul.f32 %v1067, %v55
  %v1069 = vadd.f32 %v1068, 1e-05
  %v1070 = vrsqrt.pop %v1069
  %v1071 = vmul.f32 %v1063, %v1070
  %v1072 = vlaneseq
  %v1073 = vshrl.u32 %v1072, 7
  %v1074 = vsub.s32 1, %v1073
  %v1075 = vrot.slane %v35, %v1074
  %v1076 = vmul.f32 %v1071, %v1075
  %v1077 = vlaneseq
  %v1078 = vshrl.u32 %v1077, 7
  %v1079 = vsub.s32 3, %v1078
  %v1080 = vrot.slane %v35, %v1079
  %v1081 = vadd.f32 %v1076, %v1080
  %v1084 = vunpack.c.l.s4 1966171168
  %v1085 = vunpack.c.0.s8 %v1084
  %v1086 = vlaneseq
  %v1087 = vshrl.u32 %v1086, 7
  %v1088 = vsub.s32 %v1085, %v1087
  %v1089 = vrot.slane %v1081, %v1088
  %v1090 = vcombine.high %v1089, %v1089
  %v1092 = vunpack.c.l.s4 1966171168
  %v1093 = vunpack.c.0.s8 %v1092
  %v1094 = vlaneseq
  %v1095 = vshrl.u32 %v1094, 7
  %v1096 = vsub.s32 %v1093, %v1095
  %v1097 = vrot.slane %v1089, %v1096
  %v1099 = vunpack.c.l.s4 1966171168
  %v1100 = vunpack.c.0.s8 %v1099
  %v1101 = vlaneseq
  %v1102 = vshrl.u32 %v1101, 7
  %v1103 = vsub.s32 %v1100, %v1102
  %v1104 = vrot.slane %v1090, %v1103
  %v1105 = vlaneseq
  %v1106 = vshrl.u32 %v1105, 7
  %v1107 = vsub.s32 0, %v1106
  %v1108 = vrot.slane %v1097, %v1107
  %v1109 = vlaneseq
  %v1110 = vshrl.u32 %v1109, 7
  %v1111 = vsub.s32 0, %v1110
  %v1112 = vrot.slane %v1104, %v1111
  %1115 = vset.pattern.permute.xlu0 48
  %1116 = vperm.xlu0 %1115, %v126
  %v1117 = vpop.permute.xlu0 %1116
  %v1119 = vmul.f32 %v1108, %v1117
  %v1120 = vmul.f32 %v1112, %v1117
  %1121 = vset.pattern.permute.xlu0 49
  %1122 = vperm.xlu0 %1121, %v126
  %v1123 = vpop.permute.xlu0 %1122
  %v1125 = vmul.f32 %v1108, %v1123
  %v1126 = vmul.f32 %v1112, %v1123
  %v1129 = vrot.slane %v1125, 6
  %v1130 = vrot.slane %v1126, 6
  %v1133 = vsel %vm206, %v1119, %v1129
  %v1134 = vsel %vm206, %v1120, %v1130
  %v1135 = vsel %vm209, %v1133, -inf
  %1136 = vmax.xlane.f32.xlu0 %v1135
  %v1137 = vpop.xlane.xlu0 %1136
  %v1138 = vsel %vm209, %v1134, -inf
  %1139 = vmax.xlane.f32.xlu0 %v1138
  %v1140 = vpop.xlane.xlu0 %1139
  %v1141 = vsub.f32 %v1133, %v1137
  %v1142 = vsub.f32 %v1134, %v1140
  %v1143 = vmul.f32 %v1141, 1.442695
  %v1144 = vpow.pop %v1143
  %v1145 = vmul.f32 %v1142, 1.442695
  %v1146 = vpow.pop %v1145
  %v1147 = vsel %vm209, %v1144, 0.0
  %1148 = vadd.xlane.f32.xlu0 %v1147
  %v1149 = vpop.xlane.xlu0 %1148
  %v1150 = vsel %vm209, %v1146, 0.0
  %1151 = vadd.xlane.f32.xlu0 %v1150
  %v1152 = vpop.xlane.xlu0 %1151
  %v1153 = vrcp.pop %v1149
  %v1154 = vrcp.pop %v1152
  %v1155 = vmul.f32 %v1144, %v1153
  %v1156 = vmul.f32 %v1146, %v1154
  %1158 = vrot.lane.b32.xlu0 %v232, 96
  %v1159 = vpop.permute.xlu0 %1158
  %1161 = vxpose.xlu0.b32.start [1/16] %v1159, 128
  %1162 = vxpose.xlu0.b32.cont [2/16] 0.0, 128
  %1163 = vxpose.xlu0.b32.cont [3/16] 0.0, 128
  %1164 = vxpose.xlu0.b32.cont [4/16] 0.0, 128
  %1165 = vxpose.xlu0.b32.cont [5/16] 0.0, 128
  %1166 = vxpose.xlu0.b32.cont [6/16] 0.0, 128
  %1167 = vxpose.xlu0.b32.cont [7/16] 0.0, 128
  %1168 = vxpose.xlu0.b32.cont [8/16] 0.0, 128
  %1169 = vxpose.xlu0.b32.cont [9/16] 0.0, 128
  %1170 = vxpose.xlu0.b32.cont [10/16] 0.0, 128
  %1171 = vxpose.xlu0.b32.cont [11/16] 0.0, 128
  %1172 = vxpose.xlu0.b32.cont [12/16] 0.0, 128
  %1173 = vxpose.xlu0.b32.cont [13/16] 0.0, 128
  %1174 = vxpose.xlu0.b32.cont [14/16] 0.0, 128
  %1175 = vxpose.xlu0.b32.cont [15/16] 0.0, 128
  %1176 = vxpose.xlu0.b32.end [16/16] 0.0, 128
  %v1177 = vpop.trf.xlu0
  %v1178 = vpop.trf.xlu0
  %v1179 = vpop.trf.xlu0
  %v1180 = vpop.trf.xlu0
  %v1181 = vpop.trf.xlu0
  %v1182 = vpop.trf.xlu0
  %v1183 = vpop.trf.xlu0
  %v1184 = vpop.trf.xlu0
  %v1185 = vpop.trf.xlu0
  %v1186 = vpop.trf.xlu0
  %v1187 = vpop.trf.xlu0
  %v1188 = vpop.trf.xlu0
  %v1189 = vpop.trf.xlu0
  %v1190 = vpop.trf.xlu0
  %v1191 = vpop.trf.xlu0
  %v1192 = vpop.trf.xlu0
  %v1193 = vlaneseq
  %v1194 = vshrl.u32 %v1193, 7
  %v1195 = vsub.s32 0, %v1194
  %v1196 = vrot.slane %v1155, %v1195
  %v1197 = vlaneseq
  %v1198 = vshrl.u32 %v1197, 7
  %v1199 = vsub.s32 0, %v1198
  %v1200 = vrot.slane %v1156, %v1199
  %1202 = vset.pattern.permute.xlu0 0
  %1203 = vperm.xlu0 %1202, %v1177
  %v1204 = vpop.permute.xlu0 %1203
  %v1206 = vmul.f32 %v1196, %v1204
  %v1207 = vmul.f32 %v1200, %v1204
  %v1208 = vlaneseq
  %v1209 = vshrl.u32 %v1208, 7
  %v1210 = vsub.s32 1, %v1209
  %v1211 = vrot.slane %v1155, %v1210
  %v1212 = vlaneseq
  %v1213 = vshrl.u32 %v1212, 7
  %v1214 = vsub.s32 1, %v1213
  %v1215 = vrot.slane %v1156, %v1214
  %1216 = vset.pattern.permute.xlu0 1
  %1217 = vperm.xlu0 %1216, %v1177
  %v1218 = vpop.permute.xlu0 %1217
  %v1220 = vmul.f32 %v1211, %v1218
  %v1221 = vmul.f32 %v1215, %v1218
  %v1222 = vadd.f32 %v1206, %v1220
  %v1223 = vadd.f32 %v1207, %v1221
  %v1224 = vlaneseq
  %v1225 = vshrl.u32 %v1224, 7
  %v1226 = vsub.s32 2, %v1225
  %v1227 = vrot.slane %v1155, %v1226
  %v1228 = vlaneseq
  %v1229 = vshrl.u32 %v1228, 7
  %v1230 = vsub.s32 2, %v1229
  %v1231 = vrot.slane %v1156, %v1230
  %1233 = vset.pattern.permute.xlu0 0
  %1234 = vperm.xlu0 %1233, %v1178
  %v1235 = vpop.permute.xlu0 %1234
  %v1237 = vmul.f32 %v1227, %v1235
  %v1238 = vmul.f32 %v1231, %v1235
  %v1239 = vlaneseq
  %v1240 = vshrl.u32 %v1239, 7
  %v1241 = vsub.s32 3, %v1240
  %v1242 = vrot.slane %v1155, %v1241
  %v1243 = vlaneseq
  %v1244 = vshrl.u32 %v1243, 7
  %v1245 = vsub.s32 3, %v1244
  %v1246 = vrot.slane %v1156, %v1245
  %1247 = vset.pattern.permute.xlu0 1
  %1248 = vperm.xlu0 %1247, %v1178
  %v1249 = vpop.permute.xlu0 %1248
  %v1251 = vmul.f32 %v1242, %v1249
  %v1252 = vmul.f32 %v1246, %v1249
  %v1253 = vadd.f32 %v1237, %v1251
  %v1254 = vadd.f32 %v1238, %v1252
  %v1255 = vtanh.pop %v1222
  %v1256 = vtanh.pop %v1253
  %v1257 = vtanh.pop %v1223
  %v1258 = vtanh.pop %v1254
  %v1259 = vcombine.high %v1255, 0.0
  %v1261 = vunpack.c.l.s4 1983009808
  %v1262 = vunpack.c.0.s8 %v1261
  %v1263 = vlaneseq
  %v1264 = vshrl.u32 %v1263, 7
  %v1265 = vsub.s32 %v1262, %v1264
  %v1266 = vrot.slane %v1255, %v1265
  %v1268 = vunpack.c.l.s4 1983009808
  %v1269 = vunpack.c.0.s8 %v1268
  %v1270 = vlaneseq
  %v1271 = vshrl.u32 %v1270, 7
  %v1272 = vsub.s32 %v1269, %v1271
  %v1273 = vrot.slane %v1259, %v1272
  %v1274 = vcombine.high %v1257, 0.0
  %v1276 = vunpack.c.l.s4 1983009808
  %v1277 = vunpack.c.0.s8 %v1276
  %v1278 = vlaneseq
  %v1279 = vshrl.u32 %v1278, 7
  %v1280 = vsub.s32 %v1277, %v1279
  %v1281 = vrot.slane %v1257, %v1280
  %v1283 = vunpack.c.l.s4 1983009808
  %v1284 = vunpack.c.0.s8 %v1283
  %v1285 = vlaneseq
  %v1286 = vshrl.u32 %v1285, 7
  %v1287 = vsub.s32 %v1284, %v1286
  %v1288 = vrot.slane %v1274, %v1287
  %v1289 = vcombine.low %v1266, %v1281
  %v1290 = vcombine.high %v1266, %v1281
  %v1292 = vunpack.c.l.s4 1934713408
  %v1293 = vunpack.c.0.s8 %v1292
  %v1294 = vlaneseq
  %v1295 = vshrl.u32 %v1294, 7
  %v1296 = vsub.s32 %v1293, %v1295
  %v1297 = vrot.slane %v1289, %v1296
  %v1299 = vunpack.c.l.s4 1934713408
  %v1300 = vunpack.c.0.s8 %v1299
  %v1301 = vlaneseq
  %v1302 = vshrl.u32 %v1301, 7
  %v1303 = vsub.s32 %v1300, %v1302
  %v1304 = vrot.slane %v1290, %v1303
  %v1305 = vcombine.low %v1273, %v1288
  %v1306 = vcombine.high %v1273, %v1288
  %v1308 = vunpack.c.l.s4 1934713408
  %v1309 = vunpack.c.0.s8 %v1308
  %v1310 = vlaneseq
  %v1311 = vshrl.u32 %v1310, 7
  %v1312 = vsub.s32 %v1309, %v1311
  %v1313 = vrot.slane %v1305, %v1312
  %v1315 = vunpack.c.l.s4 1934713408
  %v1316 = vunpack.c.0.s8 %v1315
  %v1317 = vlaneseq
  %v1318 = vshrl.u32 %v1317, 7
  %v1319 = vsub.s32 %v1316, %v1318
  %v1320 = vrot.slane %v1306, %v1319
  %v1321 = vcombine.high %v1297, 0.0
  %v1322 = vcombine.high %v1304, 0.0
  %v1323 = vcombine.high %v1313, 0.0
  %v1324 = vcombine.high %v1320, 0.0
  %v1325 = vcombine.high %v1256, 0.0
  %v1327 = vunpack.c.l.s4 1983009808
  %v1328 = vunpack.c.0.s8 %v1327
  %v1329 = vlaneseq
  %v1330 = vshrl.u32 %v1329, 7
  %v1331 = vsub.s32 %v1328, %v1330
  %v1332 = vrot.slane %v1256, %v1331
  %v1334 = vunpack.c.l.s4 1983009808
  %v1335 = vunpack.c.0.s8 %v1334
  %v1336 = vlaneseq
  %v1337 = vshrl.u32 %v1336, 7
  %v1338 = vsub.s32 %v1335, %v1337
  %v1339 = vrot.slane %v1325, %v1338
  %v1340 = vcombine.high %v1258, 0.0
  %v1342 = vunpack.c.l.s4 1983009808
  %v1343 = vunpack.c.0.s8 %v1342
  %v1344 = vlaneseq
  %v1345 = vshrl.u32 %v1344, 7
  %v1346 = vsub.s32 %v1343, %v1345
  %v1347 = vrot.slane %v1258, %v1346
  %v1349 = vunpack.c.l.s4 1983009808
  %v1350 = vunpack.c.0.s8 %v1349
  %v1351 = vlaneseq
  %v1352 = vshrl.u32 %v1351, 7
  %v1353 = vsub.s32 %v1350, %v1352
  %v1354 = vrot.slane %v1340, %v1353
  %v1355 = vcombine.low %v1332, %v1347
  %v1356 = vcombine.high %v1332, %v1347
  %v1358 = vunpack.c.l.s4 1934713408
  %v1359 = vunpack.c.0.s8 %v1358
  %v1360 = vlaneseq
  %v1361 = vshrl.u32 %v1360, 7
  %v1362 = vsub.s32 %v1359, %v1361
  %v1363 = vrot.slane %v1355, %v1362
  %v1365 = vunpack.c.l.s4 1934713408
  %v1366 = vunpack.c.0.s8 %v1365
  %v1367 = vlaneseq
  %v1368 = vshrl.u32 %v1367, 7
  %v1369 = vsub.s32 %v1366, %v1368
  %v1370 = vrot.slane %v1356, %v1369
  %v1371 = vcombine.low %v1339, %v1354
  %v1372 = vcombine.high %v1339, %v1354
  %v1374 = vunpack.c.l.s4 1934713408
  %v1375 = vunpack.c.0.s8 %v1374
  %v1376 = vlaneseq
  %v1377 = vshrl.u32 %v1376, 7
  %v1378 = vsub.s32 %v1375, %v1377
  %v1379 = vrot.slane %v1371, %v1378
  %v1381 = vunpack.c.l.s4 1934713408
  %v1382 = vunpack.c.0.s8 %v1381
  %v1383 = vlaneseq
  %v1384 = vshrl.u32 %v1383, 7
  %v1385 = vsub.s32 %v1382, %v1384
  %v1386 = vrot.slane %v1372, %v1385
  %v1387 = vcombine.high %v1363, 0.0
  %v1388 = vcombine.high %v1370, 0.0
  %v1389 = vcombine.high %v1379, 0.0
  %v1390 = vcombine.high %v1386, 0.0
  %1392 = vrot.lane.b32.xlu0 %v1321, 32
  %v1393 = vpop.permute.xlu0 %1392
  %1396 = vrot.lane.b32.xlu0 %v1304, 64
  %v1397 = vpop.permute.xlu0 %1396
  %1400 = vrot.lane.b32.xlu0 %v1322, 96
  %v1401 = vpop.permute.xlu0 %1400
  %1404 = vrot.lane.b32.xlu0 %v1323, 32
  %v1405 = vpop.permute.xlu0 %1404
  %1408 = vrot.lane.b32.xlu0 %v1320, 64
  %v1409 = vpop.permute.xlu0 %1408
  %1412 = vrot.lane.b32.xlu0 %v1324, 96
  %v1413 = vpop.permute.xlu0 %1412
  %1416 = vrot.lane.b32.xlu0 %v1387, 32
  %v1417 = vpop.permute.xlu0 %1416
  %1420 = vrot.lane.b32.xlu0 %v1370, 64
  %v1421 = vpop.permute.xlu0 %1420
  %1424 = vrot.lane.b32.xlu0 %v1388, 96
  %v1425 = vpop.permute.xlu0 %1424
  %1428 = vrot.lane.b32.xlu0 %v1389, 32
  %v1429 = vpop.permute.xlu0 %1428
  %1432 = vrot.lane.b32.xlu0 %v1386, 64
  %v1433 = vpop.permute.xlu0 %1432
  %1436 = vrot.lane.b32.xlu0 %v1390, 96
  %v1437 = vpop.permute.xlu0 %1436
  %v1439 = vsel %vm87, %v1297, %v1393
  %v1440 = vsel %vm512, %v1439, %v1397
  %v1441 = vsel %vm514, %v1440, %v1401
  %v1442 = vsel %vm87, %v1313, %v1405
  %v1443 = vsel %vm512, %v1442, %v1409
  %v1444 = vsel %vm514, %v1443, %v1413
  %v1445 = vsel %vm87, %v1363, %v1417
  %v1446 = vsel %vm512, %v1445, %v1421
  %v1447 = vsel %vm514, %v1446, %v1425
  %v1448 = vsel %vm87, %v1379, %v1429
  %v1449 = vsel %vm512, %v1448, %v1433
  %v1450 = vsel %vm514, %v1449, %v1437
  %v1451 = vld [vmem:[%s4 + $0x100] sm:$0xf]
  %v1452 = vld [vmem:[%s4 + $0x104] sm:$0xf]
  %v1453 = vld [vmem:[%s4 + $0x108] sm:$0xf]
  %v1454 = vld [vmem:[%s4 + $0x10c] sm:$0xf]
  %v1455 = vld [vmem:[%s4 + $0x110] sm:$0xf]
  %v1456 = vld [vmem:[%s4 + $0x114] sm:$0xf]
  %v1457 = vld [vmem:[%s4 + $0x118] sm:$0xf]
  %v1458 = vld [vmem:[%s4 + $0x11c] sm:$0xf]
  %v1459 = vld [vmem:[%s4 + $0x120] sm:$0xf]
  %v1460 = vld [vmem:[%s4 + $0x124] sm:$0xf]
  %v1461 = vld [vmem:[%s4 + $0x128] sm:$0xf]
  %v1462 = vld [vmem:[%s4 + $0x12c] sm:$0xf]
  %v1463 = vld [vmem:[%s4 + $0x130] sm:$0xf]
  %v1464 = vld [vmem:[%s4 + $0x134] sm:$0xf]
  %v1465 = vld [vmem:[%s4 + $0x138] sm:$0xf]
  %v1466 = vld [vmem:[%s4 + $0x13c] sm:$0xf]
  %v1467 = vld [vmem:[%s4 + $0x140] sm:$0xf]
  %v1468 = vld [vmem:[%s4 + $0x144] sm:$0xf]
  %v1469 = vld [vmem:[%s4 + $0x148] sm:$0xf]
  %v1470 = vld [vmem:[%s4 + $0x14c] sm:$0xf]
  %v1471 = vld [vmem:[%s4 + $0x150] sm:$0xf]
  %v1472 = vld [vmem:[%s4 + $0x154] sm:$0xf]
  %v1473 = vld [vmem:[%s4 + $0x158] sm:$0xf]
  %v1474 = vld [vmem:[%s4 + $0x15c] sm:$0xf]
  %v1475 = vld [vmem:[%s4 + $0x160] sm:$0xf]
  %v1476 = vld [vmem:[%s4 + $0x164] sm:$0xf]
  %v1477 = vld [vmem:[%s4 + $0x168] sm:$0xf]
  %v1478 = vld [vmem:[%s4 + $0x16c] sm:$0xf]
  %v1479 = vld [vmem:[%s4 + $0x170] sm:$0xf]
  %v1480 = vld [vmem:[%s4 + $0x174] sm:$0xf]
  %v1481 = vld [vmem:[%s4 + $0x178] sm:$0xf]
  %v1482 = vld [vmem:[%s4 + $0x17c] sm:$0xf]
  %v1483 = vld [vmem:[%s4 + $0x180] sm:$0xf]
  %v1484 = vld [vmem:[%s4 + $0x184] sm:$0xf]
  %v1485 = vld [vmem:[%s4 + $0x188] sm:$0xf]
  %v1486 = vld [vmem:[%s4 + $0x18c] sm:$0xf]
  %v1487 = vld [vmem:[%s4 + $0x190] sm:$0xf]
  %v1488 = vld [vmem:[%s4 + $0x194] sm:$0xf]
  %v1489 = vld [vmem:[%s4 + $0x198] sm:$0xf]
  %v1490 = vld [vmem:[%s4 + $0x19c] sm:$0xf]
  %v1491 = vld [vmem:[%s4 + $0x1a0] sm:$0xf]
  %v1492 = vld [vmem:[%s4 + $0x1a4] sm:$0xf]
  %v1493 = vld [vmem:[%s4 + $0x1a8] sm:$0xf]
  %v1494 = vld [vmem:[%s4 + $0x1ac] sm:$0xf]
  %v1495 = vld [vmem:[%s4 + $0x1b0] sm:$0xf]
  %v1496 = vld [vmem:[%s4 + $0x1b4] sm:$0xf]
  %v1497 = vld [vmem:[%s4 + $0x1b8] sm:$0xf]
  %v1498 = vld [vmem:[%s4 + $0x1bc] sm:$0xf]
  %v1499 = vld [vmem:[%s4 + $0x1c0] sm:$0xf]
  %v1500 = vld [vmem:[%s4 + $0x1c4] sm:$0xf]
  %v1501 = vld [vmem:[%s4 + $0x1c8] sm:$0xf]
  %v1502 = vld [vmem:[%s4 + $0x1cc] sm:$0xf]
  %v1503 = vld [vmem:[%s4 + $0x1d0] sm:$0xf]
  %v1504 = vld [vmem:[%s4 + $0x1d4] sm:$0xf]
  %v1505 = vld [vmem:[%s4 + $0x1d8] sm:$0xf]
  %v1506 = vld [vmem:[%s4 + $0x1dc] sm:$0xf]
  %v1507 = vld [vmem:[%s4 + $0x1e0] sm:$0xf]
  %v1508 = vld [vmem:[%s4 + $0x1e4] sm:$0xf]
  %v1509 = vld [vmem:[%s4 + $0x1e8] sm:$0xf]
  %v1510 = vld [vmem:[%s4 + $0x1ec] sm:$0xf]
  %v1511 = vld [vmem:[%s4 + $0x1f0] sm:$0xf]
  %v1512 = vld [vmem:[%s4 + $0x1f4] sm:$0xf]
  %v1513 = vld [vmem:[%s4 + $0x1f8] sm:$0xf]
  %v1514 = vld [vmem:[%s4 + $0x1fc] sm:$0xf]
  %v1515 = vpack.c.bf16 %v1441, %v1441
  %v1516 = vpack.c.bf16 %v1444, %v1444
  %v1517 = vpack.c.bf16 %v1447, %v1447
  %v1518 = vpack.c.bf16 %v1450, %v1450
  %v1519 = vlaneseq
  %v1520 = vshrl.u32 %v1519, 7
  %v1521 = vsub.s32 0, %v1520
  %v1522 = vrot.slane %v36, %v1521
  %v1587 = vunpack.c.l.b16 %v1451
  %v1588 = vunpack.c.l.b16 %v1452
  %v1589 = vunpack.c.l.b16 %v1453
  %v1590 = vunpack.c.l.b16 %v1454
  %v1591 = vunpack.c.l.b16 %v1455
  %v1592 = vunpack.c.l.b16 %v1456
  %v1593 = vunpack.c.l.b16 %v1457
  %v1594 = vunpack.c.l.b16 %v1458
  %v1595 = vunpack.c.l.b16 %v1459
  %v1596 = vunpack.c.l.b16 %v1460
  %v1597 = vunpack.c.l.b16 %v1461
  %v1598 = vunpack.c.l.b16 %v1462
  %v1599 = vunpack.c.l.b16 %v1463
  %v1600 = vunpack.c.l.b16 %v1464
  %v1601 = vunpack.c.l.b16 %v1465
  %v1602 = vunpack.c.l.b16 %v1466
  %v1603 = vunpack.c.l.b16 %v1467
  %v1604 = vunpack.c.l.b16 %v1468
  %v1605 = vunpack.c.l.b16 %v1469
  %v1606 = vunpack.c.l.b16 %v1470
  %v1607 = vunpack.c.l.b16 %v1471
  %v1608 = vunpack.c.l.b16 %v1472
  %v1609 = vunpack.c.l.b16 %v1473
  %v1610 = vunpack.c.l.b16 %v1474
  %v1611 = vunpack.c.l.b16 %v1475
  %v1612 = vunpack.c.l.b16 %v1476
  %v1613 = vunpack.c.l.b16 %v1477
  %v1614 = vunpack.c.l.b16 %v1478
  %v1615 = vunpack.c.l.b16 %v1479
  %v1616 = vunpack.c.l.b16 %v1480
  %v1617 = vunpack.c.l.b16 %v1481
  %v1618 = vunpack.c.l.b16 %v1482
  %v1619 = vunpack.c.l.b16 %v1483
  %v1620 = vunpack.c.l.b16 %v1484
  %v1621 = vunpack.c.l.b16 %v1485
  %v1622 = vunpack.c.l.b16 %v1486
  %v1623 = vunpack.c.l.b16 %v1487
  %v1624 = vunpack.c.l.b16 %v1488
  %v1625 = vunpack.c.l.b16 %v1489
  %v1626 = vunpack.c.l.b16 %v1490
  %v1627 = vunpack.c.l.b16 %v1491
  %v1628 = vunpack.c.l.b16 %v1492
  %v1629 = vunpack.c.l.b16 %v1493
  %v1630 = vunpack.c.l.b16 %v1494
  %v1631 = vunpack.c.l.b16 %v1495
  %v1632 = vunpack.c.l.b16 %v1496
  %v1633 = vunpack.c.l.b16 %v1497
  %v1634 = vunpack.c.l.b16 %v1498
  %v1635 = vunpack.c.l.b16 %v1499
  %v1636 = vunpack.c.l.b16 %v1500
  %v1637 = vunpack.c.l.b16 %v1501
  %v1638 = vunpack.c.l.b16 %v1502
  %v1639 = vunpack.c.l.b16 %v1503
  %v1640 = vunpack.c.l.b16 %v1504
  %v1641 = vunpack.c.l.b16 %v1505
  %v1642 = vunpack.c.l.b16 %v1506
  %v1643 = vunpack.c.l.b16 %v1507
  %v1644 = vunpack.c.l.b16 %v1508
  %v1645 = vunpack.c.l.b16 %v1509
  %v1646 = vunpack.c.l.b16 %v1510
  %v1647 = vunpack.c.l.b16 %v1511
  %v1648 = vunpack.c.l.b16 %v1512
  %v1649 = vunpack.c.l.b16 %v1513
  %v1650 = vunpack.c.l.b16 %v1514
  %v1651 = vpack.c.b16 %v1588, %v1587
  %v1652 = vpack.c.b16 %v1590, %v1589
  %v1653 = vpack.c.b16 %v1592, %v1591
  %v1654 = vpack.c.b16 %v1594, %v1593
  %v1655 = vpack.c.b16 %v1596, %v1595
  %v1656 = vpack.c.b16 %v1598, %v1597
  %v1657 = vpack.c.b16 %v1600, %v1599
  %v1658 = vpack.c.b16 %v1602, %v1601
  %v1659 = vpack.c.b16 %v1604, %v1603
  %v1660 = vpack.c.b16 %v1606, %v1605
  %v1661 = vpack.c.b16 %v1608, %v1607
  %v1662 = vpack.c.b16 %v1610, %v1609
  %v1663 = vpack.c.b16 %v1612, %v1611
  %v1664 = vpack.c.b16 %v1614, %v1613
  %v1665 = vpack.c.b16 %v1616, %v1615
  %v1666 = vpack.c.b16 %v1618, %v1617
  %v1667 = vpack.c.b16 %v1620, %v1619
  %v1668 = vpack.c.b16 %v1622, %v1621
  %v1669 = vpack.c.b16 %v1624, %v1623
  %v1670 = vpack.c.b16 %v1626, %v1625
  %v1671 = vpack.c.b16 %v1628, %v1627
  %v1672 = vpack.c.b16 %v1630, %v1629
  %v1673 = vpack.c.b16 %v1632, %v1631
  %v1674 = vpack.c.b16 %v1634, %v1633
  %v1675 = vpack.c.b16 %v1636, %v1635
  %v1676 = vpack.c.b16 %v1638, %v1637
  %v1677 = vpack.c.b16 %v1640, %v1639
  %v1678 = vpack.c.b16 %v1642, %v1641
  %v1679 = vpack.c.b16 %v1644, %v1643
  %v1680 = vpack.c.b16 %v1646, %v1645
  %v1681 = vpack.c.b16 %v1648, %v1647
  %v1682 = vpack.c.b16 %v1650, %v1649
  %1715 = vmatprep.subr.bf16.mxu0 0
  %1716 = vmatpush1.bf16.msra.mxu0 %v1658
  %1717 = vmatprep.subr.bf16.mxu0 0
  %1718 = vmatpush1.bf16.msra.mxu0 %v1657
  %1719 = vmatprep.subr.bf16.mxu0 0
  %1720 = vmatpush1.bf16.msra.mxu0 %v1656
  %1721 = vmatprep.subr.bf16.mxu0 0
  %1722 = vmatpush1.bf16.msra.mxu0 %v1655
  %1723 = vmatprep.subr.bf16.mxu0 0
  %1724 = vmatpush1.bf16.msra.mxu0 %v1654
  %1725 = vmatprep.subr.bf16.mxu0 0
  %1726 = vmatpush1.bf16.msra.mxu0 %v1653
  %1727 = vmatprep.subr.bf16.mxu0 0
  %1728 = vmatpush1.bf16.msra.mxu0 %v1652
  %1729 = vmatprep.subr.bf16.mxu0 0
  %1730 = vmatpush1.bf16.msra.mxu0 %v1651
  %1731 = vmatprep.subr.bf16.mxu0 0
  %1732 = vmatpush2.bf16.msra.mxu0 %v1666
  %1733 = vmatprep.subr.bf16.mxu0 0
  %1734 = vmatpush2.bf16.msra.mxu0 %v1665
  %1735 = vmatprep.subr.bf16.mxu0 0
  %1736 = vmatpush2.bf16.msra.mxu0 %v1664
  %1737 = vmatprep.subr.bf16.mxu0 0
  %1738 = vmatpush2.bf16.msra.mxu0 %v1663
  %1739 = vmatprep.subr.bf16.mxu0 0
  %1740 = vmatpush2.bf16.msra.mxu0 %v1662
  %1741 = vmatprep.subr.bf16.mxu0 0
  %1742 = vmatpush2.bf16.msra.mxu0 %v1661
  %1743 = vmatprep.subr.bf16.mxu0 0
  %1744 = vmatpush2.bf16.msra.mxu0 %v1660
  %1745 = vmatprep.subr.bf16.mxu0 0
  %1746 = vmatpush2.bf16.msra.mxu0 %v1659
  %1747 = vmatprep.mubr.bf16.mxu0 %v1516
  %1748 = vmatmul.mubr.bf16.gmra.mxu0 %v1515
  %v1749 = vpop.f32.mrf.mxu0
  %v1750 = vadd.f32 %v1522, %v1749
  %v1751 = vpop.f32.mrf.mxu0
  %v1752 = vpop.f32.mrf.mxu0
  %v1753 = vpop.f32.mrf.mxu0
  %1754 = vdwg.mxu0
  %1755 = vmatprep.subr.bf16.mxu0 0
  %1756 = vmatpush1.bf16.msra.mxu0 %v1674
  %1757 = vmatprep.subr.bf16.mxu0 0
  %1758 = vmatpush1.bf16.msra.mxu0 %v1673
  %1759 = vmatprep.subr.bf16.mxu0 0
  %1760 = vmatpush1.bf16.msra.mxu0 %v1672
  %1761 = vmatprep.subr.bf16.mxu0 0
  %1762 = vmatpush1.bf16.msra.mxu0 %v1671
  %1763 = vmatprep.subr.bf16.mxu0 0
  %1764 = vmatpush1.bf16.msra.mxu0 %v1670
  %1765 = vmatprep.subr.bf16.mxu0 0
  %1766 = vmatpush1.bf16.msra.mxu0 %v1669
  %1767 = vmatprep.subr.bf16.mxu0 0
  %1768 = vmatpush1.bf16.msra.mxu0 %v1668
  %1769 = vmatprep.subr.bf16.mxu0 0
  %1770 = vmatpush1.bf16.msra.mxu0 %v1667
  %1771 = vmatprep.subr.bf16.mxu0 0
  %1772 = vmatpush2.bf16.msra.mxu0 %v1682
  %1773 = vmatprep.subr.bf16.mxu0 0
  %1774 = vmatpush2.bf16.msra.mxu0 %v1681
  %1775 = vmatprep.subr.bf16.mxu0 0
  %1776 = vmatpush2.bf16.msra.mxu0 %v1680
  %1777 = vmatprep.subr.bf16.mxu0 0
  %1778 = vmatpush2.bf16.msra.mxu0 %v1679
  %1779 = vmatprep.subr.bf16.mxu0 0
  %1780 = vmatpush2.bf16.msra.mxu0 %v1678
  %1781 = vmatprep.subr.bf16.mxu0 0
  %1782 = vmatpush2.bf16.msra.mxu0 %v1677
  %1783 = vmatprep.subr.bf16.mxu0 0
  %1784 = vmatpush2.bf16.msra.mxu0 %v1676
  %1785 = vmatprep.subr.bf16.mxu0 0
  %1786 = vmatpush2.bf16.msra.mxu0 %v1675
  %1787 = vmatprep.mubr.bf16.mxu0 %v1518
  %1788 = vmatmul.mubr.bf16.gmra.mxu0 %v1517
  %v1789 = vpop.f32.mrf.mxu0
  %v1790 = vadd.f32 %v1750, %v1789
  %v1791 = vpop.f32.mrf.mxu0
  %v1792 = vpop.f32.mrf.mxu0
  %v1793 = vpop.f32.mrf.mxu0
  %1794 = vdwg.mxu0
  %v1795 = vadd.f32 %v1058, %v1790
  %v1796 = vsel %vm51, %v1795, 0.0
  %1797 = vadd.xlane.f32.xlu0 %v1796
  %v1798 = vpop.xlane.xlu0 %1797
  %v1799 = vmul.f32 %v1798, %v55
  %v1800 = vsub.f32 %v1795, %v1799
  %v1801 = vmul.f32 %v1800, %v1800
  %v1802 = vsel %vm51, %v1801, 0.0
  %1803 = vadd.xlane.f32.xlu0 %v1802
  %v1804 = vpop.xlane.xlu0 %1803
  %v1805 = vmul.f32 %v1804, %v55
  %v1806 = vadd.f32 %v1805, 1e-05
  %v1807 = vrsqrt.pop %v1806
  %v1808 = vmul.f32 %v1800, %v1807
  %v1809 = vld [vmem:[%s5 + $0x10] sm:$0xf]
  %v1810 = vld [vmem:[%s5 + $0x14] sm:$0xf]
  %v1811 = vld [vmem:[%s5 + $0x18] sm:$0xf]
  %v1812 = vld [vmem:[%s5 + $0x1c] sm:$0xf]
  %v1813 = vpack.c.bf16 %v1808, %v1808
  %v1814 = vlaneseq
  %v1815 = vshrl.u32 %v1814, 7
  %v1816 = vsub.s32 2, %v1815
  %v1817 = vrot.slane %v36, %v1816
  %v1822 = vunpack.c.l.b16 %v1809
  %v1823 = vunpack.c.l.b16 %v1810
  %v1824 = vunpack.c.l.b16 %v1811
  %v1825 = vunpack.c.l.b16 %v1812
  %v1826 = vpack.c.b16 %v1823, %v1822
  %v1827 = vpack.c.b16 %v1825, %v1824
  %v1831 = vsel %vm87, %v1813, 0
  %1833 = vmatprep.subr.bf16.mxu0 0
  %1834 = vmatpush1.bf16.msra.mxu0 0
  %1835 = vmatprep.subr.bf16.mxu0 0
  %1836 = vmatpush1.bf16.msra.mxu0 0
  %1837 = vmatprep.subr.bf16.mxu0 0
  %1838 = vmatpush1.bf16.msra.mxu0 0
  %1839 = vmatprep.subr.bf16.mxu0 0
  %1840 = vmatpush1.bf16.msra.mxu0 0
  %1841 = vmatprep.subr.bf16.mxu0 0
  %1842 = vmatpush1.bf16.msra.mxu0 0
  %1843 = vmatprep.subr.bf16.mxu0 0
  %1844 = vmatpush1.bf16.msra.mxu0 0
  %1845 = vmatprep.subr.bf16.mxu0 0
  %1846 = vmatpush1.bf16.msra.mxu0 %v1827
  %1847 = vmatprep.subr.bf16.mxu0 0
  %1848 = vmatpush1.bf16.msra.mxu0 %v1826
  %1849 = vmatprep.subr.bf16.mxu0 0
  %1850 = vmatpush2.bf16.msra.mxu0 0
  %1851 = vmatprep.subr.bf16.mxu0 0
  %1852 = vmatpush2.bf16.msra.mxu0 0
  %1853 = vmatprep.subr.bf16.mxu0 0
  %1854 = vmatpush2.bf16.msra.mxu0 0
  %1855 = vmatprep.subr.bf16.mxu0 0
  %1856 = vmatpush2.bf16.msra.mxu0 0
  %1857 = vmatprep.subr.bf16.mxu0 0
  %1858 = vmatpush2.bf16.msra.mxu0 0
  %1859 = vmatprep.subr.bf16.mxu0 0
  %1860 = vmatpush2.bf16.msra.mxu0 0
  %1861 = vmatprep.subr.bf16.mxu0 0
  %1862 = vmatpush2.bf16.msra.mxu0 0
  %1863 = vmatprep.subr.bf16.mxu0 0
  %1864 = vmatpush2.bf16.msra.mxu0 0
  %1865 = vmatprep.mubr.bf16.mxu0 0
  %1866 = vmatmul.mubr.bf16.gmra.mxu0 %v1831
  %v1867 = vpop.f32.mrf.mxu0
  %v1868 = vadd.f32 %v1817, %v1867
  %v1869 = vpop.f32.mrf.mxu0
  %v1870 = vpop.f32.mrf.mxu0
  %v1871 = vpop.f32.mrf.mxu0
  %1872 = vdwg.mxu0
  %v1873 = vtanh.pop %v1868
  %v1874 = vld [vmem:[%s4 + $0x240] sm:$0xf]
  %v1875 = vld [vmem:[%s4 + $0x244] sm:$0xf]
  %v1876 = vld [vmem:[%s4 + $0x248] sm:$0xf]
  %v1877 = vld [vmem:[%s4 + $0x24c] sm:$0xf]
  %v1878 = vld [vmem:[%s4 + $0x250] sm:$0xf]
  %v1879 = vld [vmem:[%s4 + $0x254] sm:$0xf]
  %v1880 = vld [vmem:[%s4 + $0x258] sm:$0xf]
  %v1881 = vld [vmem:[%s4 + $0x25c] sm:$0xf]
  %v1882 = vld [vmem:[%s4 + $0x260] sm:$0xf]
  %v1883 = vld [vmem:[%s4 + $0x264] sm:$0xf]
  %v1884 = vld [vmem:[%s4 + $0x268] sm:$0xf]
  %v1885 = vld [vmem:[%s4 + $0x26c] sm:$0xf]
  %v1886 = vld [vmem:[%s4 + $0x270] sm:$0xf]
  %v1887 = vld [vmem:[%s4 + $0x274] sm:$0xf]
  %v1888 = vld [vmem:[%s4 + $0x278] sm:$0xf]
  %v1889 = vld [vmem:[%s4 + $0x27c] sm:$0xf]
  %v1890 = vpack.c.bf16 %v1873, %v1873
  %v1907 = vunpack.c.l.b16 %v1874
  %v1908 = vunpack.c.l.b16 %v1875
  %v1909 = vunpack.c.l.b16 %v1876
  %v1910 = vunpack.c.l.b16 %v1877
  %v1911 = vunpack.c.l.b16 %v1878
  %v1912 = vunpack.c.l.b16 %v1879
  %v1913 = vunpack.c.l.b16 %v1880
  %v1914 = vunpack.c.l.b16 %v1881
  %v1915 = vunpack.c.l.b16 %v1882
  %v1916 = vunpack.c.l.b16 %v1883
  %v1917 = vunpack.c.l.b16 %v1884
  %v1918 = vunpack.c.l.b16 %v1885
  %v1919 = vunpack.c.l.b16 %v1886
  %v1920 = vunpack.c.l.b16 %v1887
  %v1921 = vunpack.c.l.b16 %v1888
  %v1922 = vunpack.c.l.b16 %v1889
  %v1923 = vpack.c.b16 %v1908, %v1907
  %v1924 = vpack.c.b16 %v1910, %v1909
  %v1925 = vpack.c.b16 %v1912, %v1911
  %v1926 = vpack.c.b16 %v1914, %v1913
  %v1927 = vpack.c.b16 %v1916, %v1915
  %v1928 = vpack.c.b16 %v1918, %v1917
  %v1929 = vpack.c.b16 %v1920, %v1919
  %v1930 = vpack.c.b16 %v1922, %v1921
  %1939 = vmatprep.subr.bf16.mxu0 0
  %1940 = vmatpush1.bf16.msra.mxu0 %v1930
  %1941 = vmatprep.subr.bf16.mxu0 0
  %1942 = vmatpush1.bf16.msra.mxu0 %v1929
  %1943 = vmatprep.subr.bf16.mxu0 0
  %1944 = vmatpush1.bf16.msra.mxu0 %v1928
  %1945 = vmatprep.subr.bf16.mxu0 0
  %1946 = vmatpush1.bf16.msra.mxu0 %v1927
  %1947 = vmatprep.subr.bf16.mxu0 0
  %1948 = vmatpush1.bf16.msra.mxu0 %v1926
  %1949 = vmatprep.subr.bf16.mxu0 0
  %1950 = vmatpush1.bf16.msra.mxu0 %v1925
  %1951 = vmatprep.subr.bf16.mxu0 0
  %1952 = vmatpush1.bf16.msra.mxu0 %v1924
  %1953 = vmatprep.subr.bf16.mxu0 0
  %1954 = vmatpush1.bf16.msra.mxu0 %v1923
  %1955 = vmatprep.subr.bf16.mxu0 0
  %1956 = vmatpush2.bf16.msra.mxu0 0
  %1957 = vmatprep.subr.bf16.mxu0 0
  %1958 = vmatpush2.bf16.msra.mxu0 0
  %1959 = vmatprep.subr.bf16.mxu0 0
  %1960 = vmatpush2.bf16.msra.mxu0 0
  %1961 = vmatprep.subr.bf16.mxu0 0
  %1962 = vmatpush2.bf16.msra.mxu0 0
  %1963 = vmatprep.subr.bf16.mxu0 0
  %1964 = vmatpush2.bf16.msra.mxu0 0
  %1965 = vmatprep.subr.bf16.mxu0 0
  %1966 = vmatpush2.bf16.msra.mxu0 0
  %1967 = vmatprep.subr.bf16.mxu0 0
  %1968 = vmatpush2.bf16.msra.mxu0 0
  %1969 = vmatprep.subr.bf16.mxu0 0
  %1970 = vmatpush2.bf16.msra.mxu0 0
  %1971 = vmatprep.mubr.bf16.mxu0 0
  %1972 = vmatmul.mubr.bf16.gmra.mxu0 %v1890
  %v1973 = vpop.f32.mrf.mxu0
  %v1974 = vadd.f32 0.0, %v1973
  %v1975 = vpop.f32.mrf.mxu0
  %v1976 = vpop.f32.mrf.mxu0
  %v1977 = vpop.f32.mrf.mxu0
  %1978 = vdwg.mxu0
  %v1979 = vadd.f32 %v1795, %v1974
  %v1980 = vlaneseq
  %v1981 = vshrl.u32 %v1980, 7
  %v1982 = vsub.s32 4, %v1981
  %v1983 = vrot.slane %v36, %v1982
  %v1984 = vadd.f32 %v1979, %v1983
  %v1985 = vsel %vm51, %v1984, 0.0
  %1986 = vadd.xlane.f32.xlu0 %v1985
  %v1987 = vpop.xlane.xlu0 %1986
  %v1988 = vmul.f32 %v1987, %v55
  %v1989 = vsub.f32 %v1984, %v1988
  %v1990 = vmul.f32 %v1989, %v1989
  %v1991 = vsel %vm51, %v1990, 0.0
  %1992 = vadd.xlane.f32.xlu0 %v1991
  %v1993 = vpop.xlane.xlu0 %1992
  %v1994 = vmul.f32 %v1993, %v55
  %v1995 = vadd.f32 %v1994, 1e-05
  %v1996 = vrsqrt.pop %v1995
  %v1997 = vmul.f32 %v1989, %v1996
  %v1998 = vlaneseq
  %v1999 = vshrl.u32 %v1998, 7
  %v2000 = vsub.s32 4, %v1999
  %v2001 = vrot.slane %v35, %v2000
  %v2002 = vmul.f32 %v1997, %v2001
  %v2003 = vlaneseq
  %v2004 = vshrl.u32 %v2003, 7
  %v2005 = vsub.s32 5, %v2004
  %v2006 = vrot.slane %v35, %v2005
  %v2007 = vadd.f32 %v2002, %v2006
  %v2008 = vld [vmem:[%s4 + $0x280] sm:$0xf]
  %v2009 = vld [vmem:[%s4 + $0x284] sm:$0xf]
  %v2010 = vld [vmem:[%s4 + $0x288] sm:$0xf]
  %v2011 = vld [vmem:[%s4 + $0x28c] sm:$0xf]
  %v2012 = vpack.c.bf16 %v2007, %v2007
  %v2013 = vlaneseq
  %v2014 = vshrl.u32 %v2013, 7
  %v2015 = vsub.s32 5, %v2014
  %v2016 = vrot.slane %v36, %v2015
  %v2021 = vunpack.c.l.b16 %v2008
  %v2022 = vunpack.c.l.b16 %v2009
  %v2023 = vunpack.c.l.b16 %v2010
  %v2024 = vunpack.c.l.b16 %v2011
  %v2025 = vpack.c.b16 %v2022, %v2021
  %v2026 = vpack.c.b16 %v2024, %v2023
  %v2030 = vsel %vm87, %v2012, 0
  %2032 = vmatprep.subr.bf16.mxu0 0
  %2033 = vmatpush1.bf16.msra.mxu0 0
  %2034 = vmatprep.subr.bf16.mxu0 0
  %2035 = vmatpush1.bf16.msra.mxu0 0
  %2036 = vmatprep.subr.bf16.mxu0 0
  %2037 = vmatpush1.bf16.msra.mxu0 0
  %2038 = vmatprep.subr.bf16.mxu0 0
  %2039 = vmatpush1.bf16.msra.mxu0 0
  %2040 = vmatprep.subr.bf16.mxu0 0
  %2041 = vmatpush1.bf16.msra.mxu0 0
  %2042 = vmatprep.subr.bf16.mxu0 0
  %2043 = vmatpush1.bf16.msra.mxu0 0
  %2044 = vmatprep.subr.bf16.mxu0 0
  %2045 = vmatpush1.bf16.msra.mxu0 %v2026
  %2046 = vmatprep.subr.bf16.mxu0 0
  %2047 = vmatpush1.bf16.msra.mxu0 %v2025
  %2048 = vmatprep.subr.bf16.mxu0 0
  %2049 = vmatpush2.bf16.msra.mxu0 0
  %2050 = vmatprep.subr.bf16.mxu0 0
  %2051 = vmatpush2.bf16.msra.mxu0 0
  %2052 = vmatprep.subr.bf16.mxu0 0
  %2053 = vmatpush2.bf16.msra.mxu0 0
  %2054 = vmatprep.subr.bf16.mxu0 0
  %2055 = vmatpush2.bf16.msra.mxu0 0
  %2056 = vmatprep.subr.bf16.mxu0 0
  %2057 = vmatpush2.bf16.msra.mxu0 0
  %2058 = vmatprep.subr.bf16.mxu0 0
  %2059 = vmatpush2.bf16.msra.mxu0 0
  %2060 = vmatprep.subr.bf16.mxu0 0
  %2061 = vmatpush2.bf16.msra.mxu0 0
  %2062 = vmatprep.subr.bf16.mxu0 0
  %2063 = vmatpush2.bf16.msra.mxu0 0
  %2064 = vmatprep.mubr.bf16.mxu0 0
  %2065 = vmatmul.mubr.bf16.gmra.mxu0 %v2030
  %v2066 = vpop.f32.mrf.mxu0
  %v2067 = vadd.f32 %v2016, %v2066
  %v2068 = vpop.f32.mrf.mxu0
  %v2069 = vpop.f32.mrf.mxu0
  %v2070 = vpop.f32.mrf.mxu0
  %2071 = vdwg.mxu0
  %2072 = vst.msk [vmem:[#allocation2] sm:$0x3] %vm51, %v2007
  %2074 = vrot.lane.b32.xlu0 %v2067, 32
  %v2075 = vpop.permute.xlu0 %2074
  %v2077 = vsel %vm87, %v2007, %v2075
  %v2078 = vsel %vm512, %v2077, 0.0
  %2079 = vst [vmem:[%s6] sm:$0x3] %v2078
  // Predicated region
  $region26: #{recurrent_transformer_rollout.1} parent=0 // pred_check
    _
  $region27: #{recurrent_transformer_rollout.1} parent=0 // pred_check_branch
    %2081 = sbr.rel (0) target = $region29
  $region28: #{recurrent_transformer_rollout.1} parent=0 // pred_region
    _
  $region29: #{recurrent_transformer_rollout.1} parent=0 // pred_fallthru
    _
  // Predicated region
  $region30: #{recurrent_transformer_rollout.1} parent=0 // pred_check
    _
  $region31: #{recurrent_transformer_rollout.1} parent=0 // pred_check_branch
    %2083 = sbr.rel (0) target = $region33
  $region32: #{recurrent_transformer_rollout.1} parent=0 // pred_region
    _
  $region33: #{recurrent_transformer_rollout.1} parent=0 // pred_fallthru
    _

</llo_original>
